<compile_context>
chip_gen: v7x
topology: tpu7x:2x2x1
jax: 0.10.0
libtpu: 0.0.40
codegen_flags: <defaults>
</compile_context>

<pallas_src>
import math
import functools

import jax
import jax.numpy as jnp
from jax.experimental import pallas as pl
from jax.experimental.pallas import tpu as pltpu


def _layer_norm(v, gamma, beta, eps=1e-5):
    mu = jnp.mean(v, axis=-1, keepdims=True)
    var = jnp.mean((v - mu) ** 2, axis=-1, keepdims=True)
    return (v - mu) * jax.lax.rsqrt(var + eps) * gamma + beta


def clip_layer_kernel(x_ref,
                      ln1_g_ref, ln1_b_ref,
                      wqkv_ref, bqkv_ref,
                      wo_ref, bo_ref,
                      ln2_g_ref, ln2_b_ref,
                      w1_ref, b1_ref,
                      w2_ref, b2_ref,
                      o_ref,
                      *, n_head: int):
    bblk, S, D = x_ref.shape
    dh = D // n_head
    bh = bblk * n_head
    m = bblk * S

    # Rows of every big GEMM = block_b * S (better MXU M-fill than S alone).
    x = x_ref[...].astype(jnp.float32).reshape(m, D)

    # ---- residual 1: pre-LN + causal multi-head self-attention ----
    h = _layer_norm(x, ln1_g_ref[0], ln1_b_ref[0])                        # f32
    qkv = jnp.dot(h.astype(jnp.bfloat16), wqkv_ref[...],
                  preferred_element_type=jnp.float32) + bqkv_ref[0]       # (m, 3D) f32
    # NOTE: 1/sqrt(d_head) is already folded into the Q columns of wqkv/bqkv.
    q = qkv[:, 0 * D:1 * D].astype(jnp.bfloat16)
    k = qkv[:, 1 * D:2 * D].astype(jnp.bfloat16)
    v = qkv[:, 2 * D:3 * D].astype(jnp.bfloat16)

    def to_heads(t):  # (m, D) -> (bblk*n_head, S, dh), batch-major for batched einsum
        return (t.reshape(bblk, S, n_head, dh)
                 .transpose(0, 2, 1, 3)
                 .reshape(bh, S, dh))

    qh, kh, vh = to_heads(q), to_heads(k), to_heads(v)

    # Batched (over batch*heads) scores + causal mask + softmax, all in f32.
    s = jnp.einsum("bqd,bkd->bqk", qh, kh,
                   preferred_element_type=jnp.float32)                    # (bh, S, S)
    rows = jax.lax.broadcasted_iota(jnp.int32, (S, S), 0)
    cols = jax.lax.broadcasted_iota(jnp.int32, (S, S), 1)
    s = jnp.where((cols > rows)[None], jnp.float32(-1e30), s)
    s = s - jnp.max(s, axis=-1, keepdims=True)
    p = jnp.exp(s)
    p = p * pl.reciprocal(jnp.sum(p, axis=-1, keepdims=True), approx=True)

    attn = jnp.einsum("bqk,bkd->bqd", p.astype(jnp.bfloat16), vh,
                      preferred_element_type=jnp.float32)                 # (bh, S, dh)
    attn = (attn.reshape(bblk, n_head, S, dh)
                .transpose(0, 2, 1, 3)
                .reshape(m, D))

    x1 = jnp.dot(attn.astype(jnp.bfloat16), wo_ref[...],
                 preferred_element_type=jnp.float32) + bo_ref[0] + x      # residual (f32)

    # ---- residual 2: pre-LN + MLP with QuickGELU ----
    h2 = _layer_norm(x1, ln2_g_ref[0], ln2_b_ref[0])
    h2 = jnp.dot(h2.astype(jnp.bfloat16), w1_ref[...],
                 preferred_element_type=jnp.float32) + b1_ref[0]
    h2 = h2 * jax.nn.sigmoid(1.702 * h2)                                  # QuickGELU (EUP)
    h2 = jnp.dot(h2.astype(jnp.bfloat16), w2_ref[...],
                 preferred_element_type=jnp.float32) + b2_ref[0]
    out = h2 + x1

    o_ref[...] = out.reshape(bblk, S, D).astype(o_ref.dtype)


def clip_layer(x, params, n_head, *, block_b=None,
               vmem_limit_bytes=64 * 1024 * 1024):
    B, S, D = x.shape
    (ln1_g, ln1_b, wqkv, bqkv, wo, bo, ln2_g, ln2_b, w1, b1, w2, b2) = params

    # Fold the attention 1/sqrt(d_head) into the Q projection (zero runtime cost).
    scale = 1.0 / math.sqrt(D // n_head)
    col_scale = jnp.concatenate([jnp.full((D,), scale, jnp.float32),
                                 jnp.ones((2 * D,), jnp.float32)])
    wqkv = wqkv * col_scale[None, :]
    bqkv = bqkv * col_scale[None, :]

    # bf16 weights for the MXU; biases / LayerNorm params stay f32.
    prepped = (ln1_g, ln1_b,
               wqkv.astype(jnp.bfloat16), bqkv,
               wo.astype(jnp.bfloat16), bo,
               ln2_g, ln2_b,
               w1.astype(jnp.bfloat16), b1,
               w2.astype(jnp.bfloat16), b2)

    # Batch a few batch elements per grid step (MXU M-fill, amortize per-step
    # overhead), but always keep >= 2 parallel grid steps (v7x has 2 TensorCores).
    if block_b is None:
        block_b = 1
        for cand in (4, 3, 2):
            if B % cand == 0 and B // cand >= 2:
                block_b = cand
                break
    assert B % block_b == 0, "block_b must divide the batch"
    grid = (B // block_b,)

    # Full-extent weight specs: constant index_map -> fetched once, reused every step.
    # TODO(synk): at real CLIP sizes (D=768/1024) on v7x, tile the 4*D MLP hidden dim
    # with an extra "arbitrary" grid axis + accumulator instead of keeping w1/w2 fully
    # resident, and pad S=77 -> 128 in the wrapper for (8,128)-aligned tiles.
    def const_spec(a):
        nd = a.ndim
        return pl.BlockSpec(a.shape, lambda b, _nd=nd: (0,) * _nd)

    kernel = functools.partial(clip_layer_kernel, n_head=n_head)
    return pl.pallas_call(
        kernel,
        out_shape=jax.ShapeDtypeStruct((B, S, D), x.dtype),
        grid_spec=pltpu.PrefetchScalarGridSpec(
            num_scalar_prefetch=0,
            grid=grid,
            in_specs=[pl.BlockSpec((block_b, S, D), lambda b: (b, 0, 0))]
                     + [const_spec(p) for p in prepped],
            out_specs=pl.BlockSpec((block_b, S, D), lambda b: (b, 0, 0)),
        ),
        compiler_params=pltpu.CompilerParams(
            dimension_semantics=("parallel",),
            vmem_limit_bytes=vmem_limit_bytes),
    )(x, *prepped)


def clip_layer_ref(x, params, n_head):
    """Plain-JAX f32 reference mirroring the PyTorch forward."""
    (ln1_g, ln1_b, wqkv, bqkv, wo, bo, ln2_g, ln2_b, w1, b1, w2, b2) = params
    B, S, D = x.shape
    dh = D // n_head

    def ln(v, g, b):
        mu = jnp.mean(v, axis=-1, keepdims=True)
        var = jnp.mean((v - mu) ** 2, axis=-1, keepdims=True)
        return (v - mu) * jax.lax.rsqrt(var + 1e-5) * g[0] + b[0]

    residue = x
    h = ln(x, ln1_g, ln1_b)
    qkv = h @ wqkv + bqkv[0]
    q, k, v = jnp.split(qkv, 3, axis=-1)
    q = q.reshape(B, S, n_head, dh).transpose(0, 2, 1, 3)
    k = k.reshape(B, S, n_head, dh).transpose(0, 2, 1, 3)
    v = v.reshape(B, S, n_head, dh).transpose(0, 2, 1, 3)
    w = jnp.einsum("bhqd,bhkd->bhqk", q, k)
    mask = jnp.triu(jnp.ones((S, S), dtype=bool), k=1)
    w = jnp.where(mask, -jnp.inf, w) / math.sqrt(dh)
    p = jax.nn.softmax(w, axis=-1)
    attn = jnp.einsum("bhqk,bhkd->bhqd", p, v).transpose(0, 2, 1, 3).reshape(B, S, D)
    attn = attn @ wo + bo[0]
    x1 = attn + residue
    residue2 = x1
    h2 = ln(x1, ln2_g, ln2_b)
    h2 = h2 @ w1 + b1[0]
    h2 = h2 * jax.nn.sigmoid(1.702 * h2)
    h2 = h2 @ w2 + b2[0]
    return h2 + residue2


if __name__ == "__main__":
    B, S, D, H = 2, 8, 32, 4  # batch, seq, n_embd, n_head

    key = jax.random.PRNGKey(0)
    ks = jax.random.split(key, 9)

    # Deterministic synthetic parameters (PyTorch nn.Linear weights are (out, in);
    # here they are stored pre-transposed as (in, out)). 1-D params carried as (1, N).
    ln1_g = jnp.ones((1, D), jnp.float32)
    ln1_b = jnp.zeros((1, D), jnp.float32)
    ln2_g = jnp.ones((1, D), jnp.float32)
    ln2_b = jnp.zeros((1, D), jnp.float32)
    wqkv = 0.02 * jax.random.normal(ks[0], (D, 3 * D), jnp.float32)
    bqkv = 0.02 * jax.random.normal(ks[1], (1, 3 * D), jnp.float32)
    wo = 0.02 * jax.random.normal(ks[2], (D, D), jnp.float32)
    bo = 0.02 * jax.random.normal(ks[3], (1, D), jnp.float32)
    w1 = 0.02 * jax.random.normal(ks[4], (D, 4 * D), jnp.float32)
    b1 = 0.02 * jax.random.normal(ks[5], (1, 4 * D), jnp.float32)
    w2 = 0.02 * jax.random.normal(ks[6], (4 * D, D), jnp.float32)
    b2 = 0.02 * jax.random.normal(ks[7], (1, D), jnp.float32)

    params = (ln1_g, ln1_b, wqkv, bqkv, wo, bo, ln2_g, ln2_b, w1, b1, w2, b2)

    x = jax.random.normal(ks[8], (B, S, D), jnp.float32)

    out = clip_layer(x, params, H)
    jax.block_until_ready(out)

    ref = clip_layer_ref(x, params, H)
    assert out.shape == (B, S, D)
    # bf16 MXU operands -> compare to the f32 reference at bf16-level tolerance.
    assert jnp.allclose(out, ref, atol=2e-2, rtol=2e-2), "mismatch vs reference"

    print("KERNEL_OK")
</pallas_src>

<mosaic_0001>
module attributes {stable_mosaic.version = 11 : i64} {
  func.func @clip_layer_kernel(%arg0: i32, %arg1: memref<1x8x32xf32, #tpu.memory_space<vmem>>, %arg2: memref<1x32xf32, #tpu.memory_space<vmem>>, %arg3: memref<1x32xf32, #tpu.memory_space<vmem>>, %arg4: memref<32x96xbf16, #tpu.memory_space<vmem>>, %arg5: memref<1x96xf32, #tpu.memory_space<vmem>>, %arg6: memref<32x32xbf16, #tpu.memory_space<vmem>>, %arg7: memref<1x32xf32, #tpu.memory_space<vmem>>, %arg8: memref<1x32xf32, #tpu.memory_space<vmem>>, %arg9: memref<1x32xf32, #tpu.memory_space<vmem>>, %arg10: memref<32x128xbf16, #tpu.memory_space<vmem>>, %arg11: memref<1x128xf32, #tpu.memory_space<vmem>>, %arg12: memref<128x32xbf16, #tpu.memory_space<vmem>>, %arg13: memref<1x32xf32, #tpu.memory_space<vmem>>, %arg14: memref<1x8x32xf32, #tpu.memory_space<vmem>>) attributes {dimension_semantics = [#tpu.dimension_semantics<parallel>], iteration_bounds = array<i64: 2>, scalar_prefetch = 0 : i64, scratch_operands = 0 : i64, tpu.core_type = #tpu.core_type<tc>, window_params = [{transform_indices = @transform_0, window_bounds = array<i64: 1, 8, 32>}, {pipeline_mode = #tpu.pipeline_mode<synchronous>, transform_indices = @transform_1, window_bounds = array<i64: 1, 32>}, {pipeline_mode = #tpu.pipeline_mode<synchronous>, transform_indices = @transform_2, window_bounds = array<i64: 1, 32>}, {pipeline_mode = #tpu.pipeline_mode<synchronous>, transform_indices = @transform_3, window_bounds = array<i64: 32, 96>}, {pipeline_mode = #tpu.pipeline_mode<synchronous>, transform_indices = @transform_4, window_bounds = array<i64: 1, 96>}, {pipeline_mode = #tpu.pipeline_mode<synchronous>, transform_indices = @transform_5, window_bounds = array<i64: 32, 32>}, {pipeline_mode = #tpu.pipeline_mode<synchronous>, transform_indices = @transform_6, window_bounds = array<i64: 1, 32>}, {pipeline_mode = #tpu.pipeline_mode<synchronous>, transform_indices = @transform_7, window_bounds = array<i64: 1, 32>}, {pipeline_mode = #tpu.pipeline_mode<synchronous>, transform_indices = @transform_8, window_bounds = array<i64: 1, 32>}, {pipeline_mode = #tpu.pipeline_mode<synchronous>, transform_indices = @transform_9, window_bounds = array<i64: 32, 128>}, {pipeline_mode = #tpu.pipeline_mode<synchronous>, transform_indices = @transform_10, window_bounds = array<i64: 1, 128>}, {pipeline_mode = #tpu.pipeline_mode<synchronous>, transform_indices = @transform_11, window_bounds = array<i64: 128, 32>}, {pipeline_mode = #tpu.pipeline_mode<synchronous>, transform_indices = @transform_12, window_bounds = array<i64: 1, 32>}, {transform_indices = @transform_13, window_bounds = array<i64: 1, 8, 32>}]} {
    %c0 = arith.constant 0 : index
    %c0_0 = arith.constant 0 : index
    %c0_1 = arith.constant 0 : index
    %0 = vector.load %arg1[%c0, %c0_0, %c0_1] : memref<1x8x32xf32, #tpu.memory_space<vmem>>, vector<1x8x32xf32>
    %1 = vector.shape_cast %0 : vector<1x8x32xf32> to vector<8x32xf32>
    %c0_2 = arith.constant 0 : index
    %c0_3 = arith.constant 0 : index
    %2 = vector.load %arg2[%c0_2, %c0_3] : memref<1x32xf32, #tpu.memory_space<vmem>>, vector<1x32xf32>
    %3 = vector.shape_cast %2 : vector<1x32xf32> to vector<32xf32>
    %c0_4 = arith.constant 0 : index
    %c0_5 = arith.constant 0 : index
    %4 = vector.load %arg3[%c0_4, %c0_5] : memref<1x32xf32, #tpu.memory_space<vmem>>, vector<1x32xf32>
    %5 = vector.shape_cast %4 : vector<1x32xf32> to vector<32xf32>
    %cst = arith.constant dense<0.000000e+00> : vector<8xf32>
    %6 = vector.multi_reduction <add>, %1, %cst [1] : vector<8x32xf32> to vector<8xf32>
    %7 = vector.shape_cast %6 : vector<8xf32> to vector<8x1xf32>
    %cst_6 = arith.constant 3.200000e+01 : f32
    %8 = vector.broadcast %cst_6 : f32 to vector<8x1xf32>
    %9 = arith.divf %7, %8 : vector<8x1xf32>
    %10 = vector.broadcast %9 : vector<8x1xf32> to vector<8x32xf32>
    %11 = arith.subf %1, %10 : vector<8x32xf32>
    %12 = arith.mulf %11, %11 : vector<8x32xf32>
    %cst_7 = arith.constant dense<0.000000e+00> : vector<8xf32>
    %13 = vector.multi_reduction <add>, %12, %cst_7 [1] : vector<8x32xf32> to vector<8xf32>
    %14 = vector.shape_cast %13 : vector<8xf32> to vector<8x1xf32>
    %cst_8 = arith.constant 3.200000e+01 : f32
    %15 = vector.broadcast %cst_8 : f32 to vector<8x1xf32>
    %16 = arith.divf %14, %15 : vector<8x1xf32>
    %17 = vector.broadcast %9 : vector<8x1xf32> to vector<8x32xf32>
    %18 = arith.subf %1, %17 : vector<8x32xf32>
    %cst_9 = arith.constant 9.99999974E-6 : f32
    %19 = vector.broadcast %cst_9 : f32 to vector<8x1xf32>
    %20 = arith.addf %16, %19 : vector<8x1xf32>
    %21 = math.rsqrt %20 : vector<8x1xf32>
    %22 = vector.broadcast %21 : vector<8x1xf32> to vector<8x32xf32>
    %23 = arith.mulf %18, %22 : vector<8x32xf32>
    %24 = vector.shape_cast %3 : vector<32xf32> to vector<1x32xf32>
    %25 = vector.broadcast %24 : vector<1x32xf32> to vector<8x32xf32>
    %26 = arith.mulf %23, %25 : vector<8x32xf32>
    %27 = vector.shape_cast %5 : vector<32xf32> to vector<1x32xf32>
    %28 = vector.broadcast %27 : vector<1x32xf32> to vector<8x32xf32>
    %29 = arith.addf %26, %28 : vector<8x32xf32>
    %30 = arith.truncf %29 : vector<8x32xf32> to vector<8x32xbf16>
    %c0_10 = arith.constant 0 : index
    %c0_11 = arith.constant 0 : index
    %31 = vector.load %arg4[%c0_10, %c0_11] : memref<32x96xbf16, #tpu.memory_space<vmem>>, vector<32x96xbf16>
    %cst_12 = arith.constant dense<0.000000e+00> : vector<8x96xf32>
    %32 = tpu.matmul %30, %31, %cst_12 {dimension_numbers = #tpu.dot_dimension_numbers<[1], [0], [0], [1], [0, 0, 1, 1], [], []>} : vector<8x32xbf16>, vector<32x96xbf16>, vector<8x96xf32> -> vector<8x96xf32>
    %c0_13 = arith.constant 0 : index
    %c0_14 = arith.constant 0 : index
    %33 = vector.load %arg5[%c0_13, %c0_14] : memref<1x96xf32, #tpu.memory_space<vmem>>, vector<1x96xf32>
    %34 = vector.shape_cast %33 : vector<1x96xf32> to vector<96xf32>
    %35 = vector.shape_cast %34 : vector<96xf32> to vector<1x96xf32>
    %36 = vector.broadcast %35 : vector<1x96xf32> to vector<8x96xf32>
    %37 = arith.addf %32, %36 : vector<8x96xf32>
    %38 = vector.extract_strided_slice %37 {offsets = [0, 0], sizes = [8, 32], strides = [1, 1]} : vector<8x96xf32> to vector<8x32xf32>
    %39 = arith.truncf %38 : vector<8x32xf32> to vector<8x32xbf16>
    %40 = vector.extract_strided_slice %37 {offsets = [0, 32], sizes = [8, 32], strides = [1, 1]} : vector<8x96xf32> to vector<8x32xf32>
    %41 = arith.truncf %40 : vector<8x32xf32> to vector<8x32xbf16>
    %42 = vector.extract_strided_slice %37 {offsets = [0, 64], sizes = [8, 32], strides = [1, 1]} : vector<8x96xf32> to vector<8x32xf32>
    %43 = arith.truncf %42 : vector<8x32xf32> to vector<8x32xbf16>
    %44 = vector.shape_cast %39 : vector<8x32xbf16> to vector<1x8x4x8xbf16>
    %45 = tpu.transpose %44, [0, 2, 1, 3] : vector<1x8x4x8xbf16> -> vector<1x4x8x8xbf16>
    %46 = vector.shape_cast %45 : vector<1x4x8x8xbf16> to vector<4x8x8xbf16>
    %47 = vector.shape_cast %41 : vector<8x32xbf16> to vector<1x8x4x8xbf16>
    %48 = tpu.transpose %47, [0, 2, 1, 3] : vector<1x8x4x8xbf16> -> vector<1x4x8x8xbf16>
    %49 = vector.shape_cast %48 : vector<1x4x8x8xbf16> to vector<4x8x8xbf16>
    %50 = vector.shape_cast %43 : vector<8x32xbf16> to vector<1x8x4x8xbf16>
    %51 = tpu.transpose %50, [0, 2, 1, 3] : vector<1x8x4x8xbf16> -> vector<1x4x8x8xbf16>
    %52 = vector.shape_cast %51 : vector<1x4x8x8xbf16> to vector<4x8x8xbf16>
    "tpu.trace_start"() <{level = 10 : i32, message = "bqd,bkd->bqk"}> : () -> ()
    %cst_15 = arith.constant dense<0.000000e+00> : vector<4x8x8xf32>
    %53 = tpu.matmul %46, %49, %cst_15 {dimension_numbers = #tpu.dot_dimension_numbers<[2], [2], [1], [1], [0, 0, 0, 1, 1, 1], [0], [0]>} : vector<4x8x8xbf16>, vector<4x8x8xbf16>, vector<4x8x8xf32> -> vector<4x8x8xf32>
    "tpu.trace_stop"() : () -> ()
    %54 = tpu.iota {dimensions = array<i32: 0>} : vector<8x8xi32>
    %55 = tpu.iota {dimensions = array<i32: 1>} : vector<8x8xi32>
    %56 = arith.cmpi sgt, %55, %54 : vector<8x8xi32>
    %57 = vector.shape_cast %56 : vector<8x8xi1> to vector<1x8x8xi1>
    %cst_16 = arith.constant -1.000000e+30 : f32
    %58 = vector.shape_cast %57 : vector<1x8x8xi1> to vector<1x8x8xi1>
    %59 = vector.broadcast %58 : vector<1x8x8xi1> to vector<4x8x8xi1>
    %60 = vector.broadcast %cst_16 : f32 to vector<4x8x8xf32>
    %61 = arith.select %59, %60, %53 : vector<4x8x8xi1>, vector<4x8x8xf32>
    %cst_17 = arith.constant dense<0xFF800000> : vector<4x8xf32>
    %62 = vector.multi_reduction <maximumf>, %61, %cst_17 [2] : vector<4x8x8xf32> to vector<4x8xf32>
    %63 = vector.shape_cast %62 : vector<4x8xf32> to vector<4x8x1xf32>
    %64 = vector.broadcast %63 : vector<4x8x1xf32> to vector<4x8x8xf32>
    %65 = arith.subf %61, %64 : vector<4x8x8xf32>
    %66 = math.exp %65 : vector<4x8x8xf32>
    %cst_18 = arith.constant dense<0.000000e+00> : vector<4x8xf32>
    %67 = vector.multi_reduction <add>, %66, %cst_18 [2] : vector<4x8x8xf32> to vector<4x8xf32>
    %68 = vector.shape_cast %67 : vector<4x8xf32> to vector<4x8x1xf32>
    %69 = tpu.reciprocal %68 {approx = true} : vector<4x8x1xf32> -> vector<4x8x1xf32>
    %70 = vector.broadcast %69 : vector<4x8x1xf32> to vector<4x8x8xf32>
    %71 = arith.mulf %66, %70 : vector<4x8x8xf32>
    %72 = arith.truncf %71 : vector<4x8x8xf32> to vector<4x8x8xbf16>
    "tpu.trace_start"() <{level = 10 : i32, message = "bqk,bkd->bqd"}> : () -> ()
    %cst_19 = arith.constant dense<0.000000e+00> : vector<4x8x8xf32>
    %73 = tpu.matmul %72, %52, %cst_19 {dimension_numbers = #tpu.dot_dimension_numbers<[2], [1], [1], [2], [0, 0, 0, 1, 1, 2], [0], [0]>} : vector<4x8x8xbf16>, vector<4x8x8xbf16>, vector<4x8x8xf32> -> vector<4x8x8xf32>
    "tpu.trace_stop"() : () -> ()
    %74 = vector.shape_cast %73 : vector<4x8x8xf32> to vector<1x4x8x8xf32>
    %75 = tpu.transpose %74, [0, 2, 1, 3] : vector<1x4x8x8xf32> -> vector<1x8x4x8xf32>
    %76 = vector.shape_cast %75 : vector<1x8x4x8xf32> to vector<8x32xf32>
    %77 = arith.truncf %76 : vector<8x32xf32> to vector<8x32xbf16>
    %c0_20 = arith.constant 0 : index
    %c0_21 = arith.constant 0 : index
    %78 = vector.load %arg6[%c0_20, %c0_21] : memref<32x32xbf16, #tpu.memory_space<vmem>>, vector<32x32xbf16>
    %cst_22 = arith.constant dense<0.000000e+00> : vector<8x32xf32>
    %79 = tpu.matmul %77, %78, %cst_22 {dimension_numbers = #tpu.dot_dimension_numbers<[1], [0], [0], [1], [0, 0, 1, 1], [], []>} : vector<8x32xbf16>, vector<32x32xbf16>, vector<8x32xf32> -> vector<8x32xf32>
    %c0_23 = arith.constant 0 : index
    %c0_24 = arith.constant 0 : index
    %80 = vector.load %arg7[%c0_23, %c0_24] : memref<1x32xf32, #tpu.memory_space<vmem>>, vector<1x32xf32>
    %81 = vector.shape_cast %80 : vector<1x32xf32> to vector<32xf32>
    %82 = vector.shape_cast %81 : vector<32xf32> to vector<1x32xf32>
    %83 = vector.broadcast %82 : vector<1x32xf32> to vector<8x32xf32>
    %84 = arith.addf %79, %83 : vector<8x32xf32>
    %85 = arith.addf %84, %1 : vector<8x32xf32>
    %c0_25 = arith.constant 0 : index
    %c0_26 = arith.constant 0 : index
    %86 = vector.load %arg8[%c0_25, %c0_26] : memref<1x32xf32, #tpu.memory_space<vmem>>, vector<1x32xf32>
    %87 = vector.shape_cast %86 : vector<1x32xf32> to vector<32xf32>
    %c0_27 = arith.constant 0 : index
    %c0_28 = arith.constant 0 : index
    %88 = vector.load %arg9[%c0_27, %c0_28] : memref<1x32xf32, #tpu.memory_space<vmem>>, vector<1x32xf32>
    %89 = vector.shape_cast %88 : vector<1x32xf32> to vector<32xf32>
    %cst_29 = arith.constant dense<0.000000e+00> : vector<8xf32>
    %90 = vector.multi_reduction <add>, %85, %cst_29 [1] : vector<8x32xf32> to vector<8xf32>
    %91 = vector.shape_cast %90 : vector<8xf32> to vector<8x1xf32>
    %cst_30 = arith.constant 3.200000e+01 : f32
    %92 = vector.broadcast %cst_30 : f32 to vector<8x1xf32>
    %93 = arith.divf %91, %92 : vector<8x1xf32>
    %94 = vector.broadcast %93 : vector<8x1xf32> to vector<8x32xf32>
    %95 = arith.subf %85, %94 : vector<8x32xf32>
    %96 = arith.mulf %95, %95 : vector<8x32xf32>
    %cst_31 = arith.constant dense<0.000000e+00> : vector<8xf32>
    %97 = vector.multi_reduction <add>, %96, %cst_31 [1] : vector<8x32xf32> to vector<8xf32>
    %98 = vector.shape_cast %97 : vector<8xf32> to vector<8x1xf32>
    %cst_32 = arith.constant 3.200000e+01 : f32
    %99 = vector.broadcast %cst_32 : f32 to vector<8x1xf32>
    %100 = arith.divf %98, %99 : vector<8x1xf32>
    %101 = vector.broadcast %93 : vector<8x1xf32> to vector<8x32xf32>
    %102 = arith.subf %85, %101 : vector<8x32xf32>
    %cst_33 = arith.constant 9.99999974E-6 : f32
    %103 = vector.broadcast %cst_33 : f32 to vector<8x1xf32>
    %104 = arith.addf %100, %103 : vector<8x1xf32>
    %105 = math.rsqrt %104 : vector<8x1xf32>
    %106 = vector.broadcast %105 : vector<8x1xf32> to vector<8x32xf32>
    %107 = arith.mulf %102, %106 : vector<8x32xf32>
    %108 = vector.shape_cast %87 : vector<32xf32> to vector<1x32xf32>
    %109 = vector.broadcast %108 : vector<1x32xf32> to vector<8x32xf32>
    %110 = arith.mulf %107, %109 : vector<8x32xf32>
    %111 = vector.shape_cast %89 : vector<32xf32> to vector<1x32xf32>
    %112 = vector.broadcast %111 : vector<1x32xf32> to vector<8x32xf32>
    %113 = arith.addf %110, %112 : vector<8x32xf32>
    %114 = arith.truncf %113 : vector<8x32xf32> to vector<8x32xbf16>
    %c0_34 = arith.constant 0 : index
    %c0_35 = arith.constant 0 : index
    %115 = vector.load %arg10[%c0_34, %c0_35] : memref<32x128xbf16, #tpu.memory_space<vmem>>, vector<32x128xbf16>
    %cst_36 = arith.constant dense<0.000000e+00> : vector<8x128xf32>
    %116 = tpu.matmul %114, %115, %cst_36 {dimension_numbers = #tpu.dot_dimension_numbers<[1], [0], [0], [1], [0, 0, 1, 1], [], []>} : vector<8x32xbf16>, vector<32x128xbf16>, vector<8x128xf32> -> vector<8x128xf32>
    %c0_37 = arith.constant 0 : index
    %c0_38 = arith.constant 0 : index
    %117 = vector.load %arg11[%c0_37, %c0_38] : memref<1x128xf32, #tpu.memory_space<vmem>>, vector<1x128xf32>
    %118 = vector.shape_cast %117 : vector<1x128xf32> to vector<128xf32>
    %119 = vector.shape_cast %118 : vector<128xf32> to vector<1x128xf32>
    %120 = vector.broadcast %119 : vector<1x128xf32> to vector<8x128xf32>
    %121 = arith.addf %116, %120 : vector<8x128xf32>
    %cst_39 = arith.constant 1.702000e+00 : f32
    %122 = vector.broadcast %cst_39 : f32 to vector<8x128xf32>
    %123 = arith.mulf %122, %121 : vector<8x128xf32>
    %124 = arith.negf %123 : vector<8x128xf32>
    %125 = math.exp %124 : vector<8x128xf32>
    %cst_40 = arith.constant 1.000000e+00 : f32
    %126 = vector.broadcast %cst_40 : f32 to vector<8x128xf32>
    %127 = arith.addf %126, %125 : vector<8x128xf32>
    %128 = arith.divf %126, %127 : vector<8x128xf32>
    %129 = arith.mulf %121, %128 : vector<8x128xf32>
    %130 = arith.truncf %129 : vector<8x128xf32> to vector<8x128xbf16>
    %c0_41 = arith.constant 0 : index
    %c0_42 = arith.constant 0 : index
    %131 = vector.load %arg12[%c0_41, %c0_42] : memref<128x32xbf16, #tpu.memory_space<vmem>>, vector<128x32xbf16>
    %cst_43 = arith.constant dense<0.000000e+00> : vector<8x32xf32>
    %132 = tpu.matmul %130, %131, %cst_43 {dimension_numbers = #tpu.dot_dimension_numbers<[1], [0], [0], [1], [0, 0, 1, 1], [], []>} : vector<8x128xbf16>, vector<128x32xbf16>, vector<8x32xf32> -> vector<8x32xf32>
    %c0_44 = arith.constant 0 : index
    %c0_45 = arith.constant 0 : index
    %133 = vector.load %arg13[%c0_44, %c0_45] : memref<1x32xf32, #tpu.memory_space<vmem>>, vector<1x32xf32>
    %134 = vector.shape_cast %133 : vector<1x32xf32> to vector<32xf32>
    %135 = vector.shape_cast %134 : vector<32xf32> to vector<1x32xf32>
    %136 = vector.broadcast %135 : vector<1x32xf32> to vector<8x32xf32>
    %137 = arith.addf %132, %136 : vector<8x32xf32>
    %138 = arith.addf %137, %85 : vector<8x32xf32>
    %139 = vector.shape_cast %138 : vector<8x32xf32> to vector<1x8x32xf32>
    %c0_46 = arith.constant 0 : index
    %c0_47 = arith.constant 0 : index
    %c0_48 = arith.constant 0 : index
    %140 = vector.load %arg14[%c0_46, %c0_47, %c0_48] : memref<1x8x32xf32, #tpu.memory_space<vmem>>, vector<1x8x32xf32>
    tpu.vector_store %arg14[%c0_46, %c0_47, %c0_48], %139 {strides = array<i32>} : memref<1x8x32xf32, #tpu.memory_space<vmem>>, vector<1x8x32xf32>,
    return
  }
  func.func @transform_0(%arg0: i32) -> (i32, i32, i32) {
    %c0_i32 = arith.constant 0 : i32
    %c0_i32_0 = arith.constant 0 : i32
    %c0_i32_1 = arith.constant 0 : i32
    return %arg0, %c0_i32, %c0_i32_0 : i32, i32, i32
  }
  func.func @transform_1(%arg0: i32) -> (i32, i32) {
    %c0_i32 = arith.constant 0 : i32
    %c0_i32_0 = arith.constant 0 : i32
    %c0_i32_1 = arith.constant 0 : i32
    return %c0_i32, %c0_i32_0 : i32, i32
  }
  func.func @transform_2(%arg0: i32) -> (i32, i32) {
    %c0_i32 = arith.constant 0 : i32
    %c0_i32_0 = arith.constant 0 : i32
    %c0_i32_1 = arith.constant 0 : i32
    return %c0_i32, %c0_i32_0 : i32, i32
  }
  func.func @transform_3(%arg0: i32) -> (i32, i32) {
    %c0_i32 = arith.constant 0 : i32
    %c0_i32_0 = arith.constant 0 : i32
    %c0_i32_1 = arith.constant 0 : i32
    return %c0_i32, %c0_i32_0 : i32, i32
  }
  func.func @transform_4(%arg0: i32) -> (i32, i32) {
    %c0_i32 = arith.constant 0 : i32
    %c0_i32_0 = arith.constant 0 : i32
    %c0_i32_1 = arith.constant 0 : i32
    return %c0_i32, %c0_i32_0 : i32, i32
  }
  func.func @transform_5(%arg0: i32) -> (i32, i32) {
    %c0_i32 = arith.constant 0 : i32
    %c0_i32_0 = arith.constant 0 : i32
    %c0_i32_1 = arith.constant 0 : i32
    return %c0_i32, %c0_i32_0 : i32, i32
  }
  func.func @transform_6(%arg0: i32) -> (i32, i32) {
    %c0_i32 = arith.constant 0 : i32
    %c0_i32_0 = arith.constant 0 : i32
    %c0_i32_1 = arith.constant 0 : i32
    return %c0_i32, %c0_i32_0 : i32, i32
  }
  func.func @transform_7(%arg0: i32) -> (i32, i32) {
    %c0_i32 = arith.constant 0 : i32
    %c0_i32_0 = arith.constant 0 : i32
    %c0_i32_1 = arith.constant 0 : i32
    return %c0_i32, %c0_i32_0 : i32, i32
  }
  func.func @transform_8(%arg0: i32) -> (i32, i32) {
    %c0_i32 = arith.constant 0 : i32
    %c0_i32_0 = arith.constant 0 : i32
    %c0_i32_1 = arith.constant 0 : i32
    return %c0_i32, %c0_i32_0 : i32, i32
  }
  func.func @transform_9(%arg0: i32) -> (i32, i32) {
    %c0_i32 = arith.constant 0 : i32
    %c0_i32_0 = arith.constant 0 : i32
    %c0_i32_1 = arith.constant 0 : i32
    return %c0_i32, %c0_i32_0 : i32, i32
  }
  func.func @transform_10(%arg0: i32) -> (i32, i32) {
    %c0_i32 = arith.constant 0 : i32
    %c0_i32_0 = arith.constant 0 : i32
    %c0_i32_1 = arith.constant 0 : i32
    return %c0_i32, %c0_i32_0 : i32, i32
  }
  func.func @transform_11(%arg0: i32) -> (i32, i32) {
    %c0_i32 = arith.constant 0 : i32
    %c0_i32_0 = arith.constant 0 : i32
    %c0_i32_1 = arith.constant 0 : i32
    return %c0_i32, %c0_i32_0 : i32, i32
  }
  func.func @transform_12(%arg0: i32) -> (i32, i32) {
    %c0_i32 = arith.constant 0 : i32
    %c0_i32_0 = arith.constant 0 : i32
    %c0_i32_1 = arith.constant 0 : i32
    return %c0_i32, %c0_i32_0 : i32, i32
  }
  func.func @transform_13(%arg0: i32) -> (i32, i32, i32) {
    %c0_i32 = arith.constant 0 : i32
    %c0_i32_0 = arith.constant 0 : i32
    %c0_i32_1 = arith.constant 0 : i32
    return %arg0, %c0_i32, %c0_i32_0 : i32, i32, i32
  }
}

</mosaic_0001>

<llo_original>
// kernel: tpu_custom_call.1
$region0: #{tpu_custom_call.1}
  #allocation0 [shape = 'u32[]', space=smem, size = 0x4, offset = 0x4, fixed_abs, tag = 'smem constant byte address 0x4 - core index']
  #allocation1 [shape = 'u32[144,128]{1,0:T(1,128)}', space=vmem, size = 0x12000, scoped, tag = 'internal scratch']
  %s0 = inlined_call_operand.hbm [shape: f32[2,8,32], index: 0, kind: input, shape index: {}]
  %s1 = inlined_call_operand.hbm [shape: f32[1,32], index: 1, kind: input, shape index: {}]
  %s2 = inlined_call_operand.hbm [shape: f32[1,32], index: 2, kind: input, shape index: {}]
  %s3 = inlined_call_operand.hbm [shape: bf16[32,96], index: 3, kind: input, shape index: {}]
  %s4 = inlined_call_operand.hbm [shape: f32[1,96], index: 4, kind: input, shape index: {}]
  %s5 = inlined_call_operand.hbm [shape: bf16[32,32], index: 5, kind: input, shape index: {}]
  %s6 = inlined_call_operand.hbm [shape: f32[1,32], index: 6, kind: input, shape index: {}]
  %s7 = inlined_call_operand.hbm [shape: f32[1,32], index: 7, kind: input, shape index: {}]
  %s8 = inlined_call_operand.hbm [shape: f32[1,32], index: 8, kind: input, shape index: {}]
  %s9 = inlined_call_operand.hbm [shape: bf16[32,128], index: 9, kind: input, shape index: {}]
  %s10 = inlined_call_operand.hbm [shape: f32[1,128], index: 10, kind: input, shape index: {}]
  %s11 = inlined_call_operand.hbm [shape: bf16[128,32], index: 11, kind: input, shape index: {}]
  %s12 = inlined_call_operand.hbm [shape: f32[1,32], index: 12, kind: input, shape index: {}]
  %s13 = inlined_call_operand.hbm [shape: f32[2,8,32], index: 13, kind: output, shape index: {}]
  %s14 = sld [smem:[#allocation0]]
  $region137: #{tpu_custom_call.1} parent=0
    _
  %s16 = ssub.s32 1, %s14
  %s17 = scalar_select 0, %s16, %s14
  $region1: #{tpu_custom_call.1} parent=0
    #allocation2 [shape = 'u8[8192]{0}', space=vmem, size = 0x2000, scoped, tag = 'input window, operand 0']
    #allocation3 [shape = 's32[2]{0}', space=sflag, size = 0x8, scoped, tag = 'scoped memory for tpu_custom_call.1']
    #allocation4 [shape = 's32[2]{0}', space=sflag, size = 0x8, scoped, tag = 'scoped memory for tpu_custom_call.1']
    #allocation5 [shape = 'u8[512]{0}', space=vmem, size = 0x400, scoped, tag = 'input window, operand 1, single buffered']
    #allocation6 [shape = 's32[1]{0}', space=sflag, size = 0x4, scoped, tag = 'scoped memory for tpu_custom_call.1']
    #allocation7 [shape = 'u8[512]{0}', space=vmem, size = 0x400, scoped, tag = 'input window, operand 2, single buffered']
    #allocation8 [shape = 'u8[8192]{0}', space=vmem, size = 0x2000, scoped, tag = 'input window, operand 3, single buffered']
    #allocation9 [shape = 's32[1]{0}', space=sflag, size = 0x4, scoped, tag = 'scoped memory for tpu_custom_call.1']
    #allocation10 [shape = 'u8[512]{0}', space=vmem, size = 0x400, scoped, tag = 'input window, operand 4, single buffered']
    #allocation11 [shape = 'u8[8192]{0}', space=vmem, size = 0x2000, scoped, tag = 'input window, operand 5, single buffered']
    #allocation12 [shape = 's32[1]{0}', space=sflag, size = 0x4, scoped, tag = 'scoped memory for tpu_custom_call.1']
    #allocation13 [shape = 'u8[512]{0}', space=vmem, size = 0x400, scoped, tag = 'input window, operand 6, single buffered']
    #allocation14 [shape = 'u8[512]{0}', space=vmem, size = 0x400, scoped, tag = 'input window, operand 7, single buffered']
    #allocation15 [shape = 's32[1]{0}', space=sflag, size = 0x4, scoped, tag = 'scoped memory for tpu_custom_call.1']
    #allocation16 [shape = 'u8[512]{0}', space=vmem, size = 0x400, scoped, tag = 'input window, operand 8, single buffered']
    #allocation17 [shape = 'u8[8192]{0}', space=vmem, size = 0x2000, scoped, tag = 'input window, operand 9, single buffered']
    #allocation18 [shape = 's32[1]{0}', space=sflag, size = 0x4, scoped, tag = 'scoped memory for tpu_custom_call.1']
    #allocation19 [shape = 'u8[512]{0}', space=vmem, size = 0x400, scoped, tag = 'input window, operand 10, single buffered']
    #allocation20 [shape = 'u8[32768]{0}', space=vmem, size = 0x8000, scoped, tag = 'input window, operand 11, single buffered']
    #allocation21 [shape = 's32[1]{0}', space=sflag, size = 0x4, scoped, tag = 'scoped memory for tpu_custom_call.1']
    #allocation22 [shape = 'u8[512]{0}', space=vmem, size = 0x400, scoped, tag = 'input window, operand 12, single buffered']
    #allocation23 [shape = 'u8[8192]{0}', space=vmem, size = 0x2000, scoped, tag = 'output window, operand 0']
    %18 = vsyncpa [#allocation3], 0
    %s19 = scalar_lea.sflag [#allocation3], 1
    %20 = vsyncpa %s19, 0
    %21 = vsyncpa [#allocation6], 0
    %22 = vsyncpa [#allocation9], 0
    %23 = vsyncpa [#allocation12], 0
    %24 = vsyncpa [#allocation15], 0
    %25 = vsyncpa [#allocation18], 0
    %26 = vsyncpa [#allocation21], 0
    %27 = vsyncpa [#allocation4], 0
    %s28 = scalar_lea.sflag [#allocation4], 1
    %29 = vsyncpa %s28, 0
    loop: start=0, step=1, limit=4
    $region2: #{tpu_custom_call.1} parent=1 // loop_pre_header
      _
    $region3: #{tpu_custom_call.1} parent=1 // loop_header
      %s31 = sphi 0, %s35
      %p32 = scmp.ge.s32.totalorder %s31, 4
      %s41 = sphi 0, %s43
      %s44 = sphi 0, %s41
      %s45 = sphi 0, %s44
      %s61 = sphi 0, %s45
      %s65 = sphi 0, %s65
      %s67 = sphi 0, %s65
      %s68 = sphi 0, %s67
      %s82 = sphi 0, %s68
      %s86 = sphi 0, %s86
      %s88 = sphi 0, %s86
      %s89 = sphi 0, %s88
      %s103 = sphi 0, %s89
      %s107 = sphi 0, %s107
      %s109 = sphi 0, %s107
      %s110 = sphi 0, %s109
      %s124 = sphi 0, %s110
      %s128 = sphi 0, %s128
      %s130 = sphi 0, %s128
      %s131 = sphi 0, %s130
      %s145 = sphi 0, %s131
      %s149 = sphi 0, %s149
      %s151 = sphi 0, %s149
      %s152 = sphi 0, %s151
      %s166 = sphi 0, %s152
      %s170 = sphi 0, %s170
      %s172 = sphi 0, %s170
      %s173 = sphi 0, %s172
      %s187 = sphi 0, %s173
      %s191 = sphi 0, %s191
      %s193 = sphi 0, %s191
      %s194 = sphi 0, %s193
      %s208 = sphi 0, %s194
      %s212 = sphi 0, %s212
      %s214 = sphi 0, %s212
      %s215 = sphi 0, %s214
      %s229 = sphi 0, %s215
      %s233 = sphi 0, %s233
      %s235 = sphi 0, %s233
      %s236 = sphi 0, %s235
      %s250 = sphi 0, %s236
      %s254 = sphi 0, %s254
      %s256 = sphi 0, %s254
      %s257 = sphi 0, %s256
      %s271 = sphi 0, %s257
      %s275 = sphi 0, %s275
      %s277 = sphi 0, %s275
      %s278 = sphi 0, %s277
      %s292 = sphi 0, %s278
      %s296 = sphi 0, %s296
      %s298 = sphi 0, %s296
      %s299 = sphi 0, %s298
      %s313 = sphi 0, %s299
      %s319 = sphi 0, %s321
      %s322 = sphi 0, %s319
      %s323 = sphi 0, %s322
      %s339 = sphi 0, %s323
    $region4: #{tpu_custom_call.1} parent=1 // loop_header_branch
      %34 = sbr.rel (%p32) target = $region8
    $region5: #{tpu_custom_call.1} parent=1 // loop_body
      %s36 = ssub.s32 %s31, 1
      %s37 = ssub.s32 %s31, 2
      %s38 = sadd.s32 %s31, 1
      %s39 = ssub.s32 %s31, %s38
      %p40 = scmp.eq.s32.totalorder %s39, 0
      %s42 = sadd.s32 %s41, 1
      %s43 = scalar_select %p40, %s41, %s42
      %p46 = pneg %p40
      %p47 = scmp.eq.s32.totalorder %s31, 1
      %p48 = por %p46, %p47
      %p49 = scmp.ne.s32.totalorder %s41, %s44
      %p50 = scmp.eq.s32.totalorder %s31, 0
      %p51 = por %p49, %p50
      %p52 = scmp.ne.s32.totalorder %s41, %s44
      %p53 = scmp.eq.s32.totalorder %s36, 1
      %p54 = por %p52, %p53
      %p55 = scmp.ne.s32.totalorder %s44, %s45
      %p56 = scmp.eq.s32.totalorder %s36, 0
      %p57 = por %p55, %p56
      %p58 = scmp.ne.s32.totalorder %s44, %s45
      %p59 = scmp.eq.s32.totalorder %s37, 1
      %p60 = por %p58, %p59
      %p62 = scmp.ne.s32.totalorder %s45, %s61
      %p63 = scmp.eq.s32.totalorder %s37, 0
      %p64 = por %p62, %p63
      %s66 = sadd.s32 %s65, 1
      %p69 = scmp.eq.s32.totalorder %s31, 1
      %p70 = scmp.ne.s32.totalorder %s65, %s67
      %p71 = scmp.eq.s32.totalorder %s31, 0
      %p72 = por %p70, %p71
      %p73 = scmp.ne.s32.totalorder %s65, %s67
      %p74 = scmp.eq.s32.totalorder %s36, 1
      %p75 = por %p73, %p74
      %p76 = scmp.ne.s32.totalorder %s67, %s68
      %p77 = scmp.eq.s32.totalorder %s36, 0
      %p78 = por %p76, %p77
      %p79 = scmp.ne.s32.totalorder %s67, %s68
      %p80 = scmp.eq.s32.totalorder %s37, 1
      %p81 = por %p79, %p80
      %p83 = scmp.ne.s32.totalorder %s68, %s82
      %p84 = scmp.eq.s32.totalorder %s37, 0
      %p85 = por %p83, %p84
      %s87 = sadd.s32 %s86, 1
      %p90 = scmp.eq.s32.totalorder %s31, 1
      %p91 = scmp.ne.s32.totalorder %s86, %s88
      %p92 = scmp.eq.s32.totalorder %s31, 0
      %p93 = por %p91, %p92
      %p94 = scmp.ne.s32.totalorder %s86, %s88
      %p95 = scmp.eq.s32.totalorder %s36, 1
      %p96 = por %p94, %p95
      %p97 = scmp.ne.s32.totalorder %s88, %s89
      %p98 = scmp.eq.s32.totalorder %s36, 0
      %p99 = por %p97, %p98
      %p100 = scmp.ne.s32.totalorder %s88, %s89
      %p101 = scmp.eq.s32.totalorder %s37, 1
      %p102 = por %p100, %p101
      %p104 = scmp.ne.s32.totalorder %s89, %s103
      %p105 = scmp.eq.s32.totalorder %s37, 0
      %p106 = por %p104, %p105
      %s108 = sadd.s32 %s107, 1
      %p111 = scmp.eq.s32.totalorder %s31, 1
      %p112 = scmp.ne.s32.totalorder %s107, %s109
      %p113 = scmp.eq.s32.totalorder %s31, 0
      %p114 = por %p112, %p113
      %p115 = scmp.ne.s32.totalorder %s107, %s109
      %p116 = scmp.eq.s32.totalorder %s36, 1
      %p117 = por %p115, %p116
      %p118 = scmp.ne.s32.totalorder %s109, %s110
      %p119 = scmp.eq.s32.totalorder %s36, 0
      %p120 = por %p118, %p119
      %p121 = scmp.ne.s32.totalorder %s109, %s110
      %p122 = scmp.eq.s32.totalorder %s37, 1
      %p123 = por %p121, %p122
      %p125 = scmp.ne.s32.totalorder %s110, %s124
      %p126 = scmp.eq.s32.totalorder %s37, 0
      %p127 = por %p125, %p126
      %s129 = sadd.s32 %s128, 1
      %p132 = scmp.eq.s32.totalorder %s31, 1
      %p133 = scmp.ne.s32.totalorder %s128, %s130
      %p134 = scmp.eq.s32.totalorder %s31, 0
      %p135 = por %p133, %p134
      %p136 = scmp.ne.s32.totalorder %s128, %s130
      %p137 = scmp.eq.s32.totalorder %s36, 1
      %p138 = por %p136, %p137
      %p139 = scmp.ne.s32.totalorder %s130, %s131
      %p140 = scmp.eq.s32.totalorder %s36, 0
      %p141 = por %p139, %p140
      %p142 = scmp.ne.s32.totalorder %s130, %s131
      %p143 = scmp.eq.s32.totalorder %s37, 1
      %p144 = por %p142, %p143
      %p146 = scmp.ne.s32.totalorder %s131, %s145
      %p147 = scmp.eq.s32.totalorder %s37, 0
      %p148 = por %p146, %p147
      %s150 = sadd.s32 %s149, 1
      %p153 = scmp.eq.s32.totalorder %s31, 1
      %p154 = scmp.ne.s32.totalorder %s149, %s151
      %p155 = scmp.eq.s32.totalorder %s31, 0
      %p156 = por %p154, %p155
      %p157 = scmp.ne.s32.totalorder %s149, %s151
      %p158 = scmp.eq.s32.totalorder %s36, 1
      %p159 = por %p157, %p158
      %p160 = scmp.ne.s32.totalorder %s151, %s152
      %p161 = scmp.eq.s32.totalorder %s36, 0
      %p162 = por %p160, %p161
      %p163 = scmp.ne.s32.totalorder %s151, %s152
      %p164 = scmp.eq.s32.totalorder %s37, 1
      %p165 = por %p163, %p164
      %p167 = scmp.ne.s32.totalorder %s152, %s166
      %p168 = scmp.eq.s32.totalorder %s37, 0
      %p169 = por %p167, %p168
      %s171 = sadd.s32 %s170, 1
      %p174 = scmp.eq.s32.totalorder %s31, 1
      %p175 = scmp.ne.s32.totalorder %s170, %s172
      %p176 = scmp.eq.s32.totalorder %s31, 0
      %p177 = por %p175, %p176
      %p178 = scmp.ne.s32.totalorder %s170, %s172
      %p179 = scmp.eq.s32.totalorder %s36, 1
      %p180 = por %p178, %p179
      %p181 = scmp.ne.s32.totalorder %s172, %s173
      %p182 = scmp.eq.s32.totalorder %s36, 0
      %p183 = por %p181, %p182
      %p184 = scmp.ne.s32.totalorder %s172, %s173
      %p185 = scmp.eq.s32.totalorder %s37, 1
      %p186 = por %p184, %p185
      %p188 = scmp.ne.s32.totalorder %s173, %s187
      %p189 = scmp.eq.s32.totalorder %s37, 0
      %p190 = por %p188, %p189
      %s192 = sadd.s32 %s191, 1
      %p195 = scmp.eq.s32.totalorder %s31, 1
      %p196 = scmp.ne.s32.totalorder %s191, %s193
      %p197 = scmp.eq.s32.totalorder %s31, 0
      %p198 = por %p196, %p197
      %p199 = scmp.ne.s32.totalorder %s191, %s193
      %p200 = scmp.eq.s32.totalorder %s36, 1
      %p201 = por %p199, %p200
      %p202 = scmp.ne.s32.totalorder %s193, %s194
      %p203 = scmp.eq.s32.totalorder %s36, 0
      %p204 = por %p202, %p203
      %p205 = scmp.ne.s32.totalorder %s193, %s194
      %p206 = scmp.eq.s32.totalorder %s37, 1
      %p207 = por %p205, %p206
      %p209 = scmp.ne.s32.totalorder %s194, %s208
      %p210 = scmp.eq.s32.totalorder %s37, 0
      %p211 = por %p209, %p210
      %s213 = sadd.s32 %s212, 1
      %p216 = scmp.eq.s32.totalorder %s31, 1
      %p217 = scmp.ne.s32.totalorder %s212, %s214
      %p218 = scmp.eq.s32.totalorder %s31, 0
      %p219 = por %p217, %p218
      %p220 = scmp.ne.s32.totalorder %s212, %s214
      %p221 = scmp.eq.s32.totalorder %s36, 1
      %p222 = por %p220, %p221
      %p223 = scmp.ne.s32.totalorder %s214, %s215
      %p224 = scmp.eq.s32.totalorder %s36, 0
      %p225 = por %p223, %p224
      %p226 = scmp.ne.s32.totalorder %s214, %s215
      %p227 = scmp.eq.s32.totalorder %s37, 1
      %p228 = por %p226, %p227
      %p230 = scmp.ne.s32.totalorder %s215, %s229
      %p231 = scmp.eq.s32.totalorder %s37, 0
      %p232 = por %p230, %p231
      %s234 = sadd.s32 %s233, 1
      %p237 = scmp.eq.s32.totalorder %s31, 1
      %p238 = scmp.ne.s32.totalorder %s233, %s235
      %p239 = scmp.eq.s32.totalorder %s31, 0
      %p240 = por %p238, %p239
      %p241 = scmp.ne.s32.totalorder %s233, %s235
      %p242 = scmp.eq.s32.totalorder %s36, 1
      %p243 = por %p241, %p242
      %p244 = scmp.ne.s32.totalorder %s235, %s236
      %p245 = scmp.eq.s32.totalorder %s36, 0
      %p246 = por %p244, %p245
      %p247 = scmp.ne.s32.totalorder %s235, %s236
      %p248 = scmp.eq.s32.totalorder %s37, 1
      %p249 = por %p247, %p248
      %p251 = scmp.ne.s32.totalorder %s236, %s250
      %p252 = scmp.eq.s32.totalorder %s37, 0
      %p253 = por %p251, %p252
      %s255 = sadd.s32 %s254, 1
      %p258 = scmp.eq.s32.totalorder %s31, 1
      %p259 = scmp.ne.s32.totalorder %s254, %s256
      %p260 = scmp.eq.s32.totalorder %s31, 0
      %p261 = por %p259, %p260
      %p262 = scmp.ne.s32.totalorder %s254, %s256
      %p263 = scmp.eq.s32.totalorder %s36, 1
      %p264 = por %p262, %p263
      %p265 = scmp.ne.s32.totalorder %s256, %s257
      %p266 = scmp.eq.s32.totalorder %s36, 0
      %p267 = por %p265, %p266
      %p268 = scmp.ne.s32.totalorder %s256, %s257
      %p269 = scmp.eq.s32.totalorder %s37, 1
      %p270 = por %p268, %p269
      %p272 = scmp.ne.s32.totalorder %s257, %s271
      %p273 = scmp.eq.s32.totalorder %s37, 0
      %p274 = por %p272, %p273
      %s276 = sadd.s32 %s275, 1
      %p279 = scmp.eq.s32.totalorder %s31, 1
      %p280 = scmp.ne.s32.totalorder %s275, %s277
      %p281 = scmp.eq.s32.totalorder %s31, 0
      %p282 = por %p280, %p281
      %p283 = scmp.ne.s32.totalorder %s275, %s277
      %p284 = scmp.eq.s32.totalorder %s36, 1
      %p285 = por %p283, %p284
      %p286 = scmp.ne.s32.totalorder %s277, %s278
      %p287 = scmp.eq.s32.totalorder %s36, 0
      %p288 = por %p286, %p287
      %p289 = scmp.ne.s32.totalorder %s277, %s278
      %p290 = scmp.eq.s32.totalorder %s37, 1
      %p291 = por %p289, %p290
      %p293 = scmp.ne.s32.totalorder %s278, %s292
      %p294 = scmp.eq.s32.totalorder %s37, 0
      %p295 = por %p293, %p294
      %s297 = sadd.s32 %s296, 1
      %p300 = scmp.eq.s32.totalorder %s31, 1
      %p301 = scmp.ne.s32.totalorder %s296, %s298
      %p302 = scmp.eq.s32.totalorder %s31, 0
      %p303 = por %p301, %p302
      %p304 = scmp.ne.s32.totalorder %s296, %s298
      %p305 = scmp.eq.s32.totalorder %s36, 1
      %p306 = por %p304, %p305
      %p307 = scmp.ne.s32.totalorder %s298, %s299
      %p308 = scmp.eq.s32.totalorder %s36, 0
      %p309 = por %p307, %p308
      %p310 = scmp.ne.s32.totalorder %s298, %s299
      %p311 = scmp.eq.s32.totalorder %s37, 1
      %p312 = por %p310, %p311
      %p314 = scmp.ne.s32.totalorder %s299, %s313
      %p315 = scmp.eq.s32.totalorder %s37, 0
      %p316 = por %p314, %p315
      %s317 = ssub.s32 %s31, %s38
      %p318 = scmp.eq.s32.totalorder %s317, 0
      %s320 = sadd.s32 %s319, 1
      %s321 = scalar_select %p318, %s319, %s320
      %p324 = pneg %p318
      %p325 = scmp.eq.s32.totalorder %s31, 1
      %p326 = por %p324, %p325
      %p327 = scmp.ne.s32.totalorder %s319, %s322
      %p328 = scmp.eq.s32.totalorder %s31, 0
      %p329 = por %p327, %p328
      %p330 = scmp.ne.s32.totalorder %s319, %s322
      %p331 = scmp.eq.s32.totalorder %s36, 1
      %p332 = por %p330, %p331
      %p333 = scmp.ne.s32.totalorder %s322, %s323
      %p334 = scmp.eq.s32.totalorder %s36, 0
      %p335 = por %p333, %p334
      %p336 = scmp.ne.s32.totalorder %s322, %s323
      %p337 = scmp.eq.s32.totalorder %s37, 1
      %p338 = por %p336, %p337
      %p340 = scmp.ne.s32.totalorder %s323, %s339
      %p341 = scmp.eq.s32.totalorder %s37, 0
      %p342 = por %p340, %p341
      %p343 = scmp.le.s32.totalorder 1, %s31
      %p344 = scmp.lt.s32.totalorder %s31, 3
      %p345 = pnand %p343, %p344
      %p346 = pneg %p345
      // Predicated region
      $region9: #{tpu_custom_call.1} parent=5 // pred_check
        _
      $region10: #{tpu_custom_call.1} parent=5 // pred_check_branch
        %348 = sbr.rel (%p345) target = $region12
      $region11: #{tpu_custom_call.1} parent=5 // pred_region
        %s349 = ssub.s32 %s31, 1
        // Predicated region
        $region13: #{tpu_custom_call.1} parent=11 // pred_check
          %p350 = pneg %p78
        $region14: #{tpu_custom_call.1} parent=11 // pred_check_branch
          %352 = sbr.rel (%p350) target = $region16
        $region15: #{tpu_custom_call.1} parent=11 // pred_region
          %s354 = ssub.s32 16, 16
          %355 = vsyncadd [#allocation6], %s354
          %s357 = sshll.u32 [#allocation5], 4
          %s358 = int_to_ptr.vmem [resolvable:$true] %s357
          %360 = dma.hbm_to_vmem [thread:$0]  %s1, 16, %s358, [#allocation6]
        $region16: #{tpu_custom_call.1} parent=11 // pred_fallthru
          _
        // Predicated region
        $region17: #{tpu_custom_call.1} parent=11 // pred_check
          %p361 = pneg %p99
        $region18: #{tpu_custom_call.1} parent=11 // pred_check_branch
          %363 = sbr.rel (%p361) target = $region20
        $region19: #{tpu_custom_call.1} parent=11 // pred_region
          %s365 = ssub.s32 16, 16
          %366 = vsyncadd [#allocation6], %s365
          %s368 = sshll.u32 [#allocation7], 4
          %s369 = int_to_ptr.vmem [resolvable:$true] %s368
          %371 = dma.hbm_to_vmem [thread:$0]  %s2, 16, %s369, [#allocation6]
        $region20: #{tpu_custom_call.1} parent=11 // pred_fallthru
          _
        // Predicated region
        $region21: #{tpu_custom_call.1} parent=11 // pred_check
          %p372 = pneg %p120
        $region22: #{tpu_custom_call.1} parent=11 // pred_check_branch
          %374 = sbr.rel (%p372) target = $region24
        $region23: #{tpu_custom_call.1} parent=11 // pred_region
          %s376 = ssub.s32 256, 256
          %377 = vsyncadd [#allocation9], %s376
          %s378 = sshll.u32 [#allocation8], 4
          %s379 = int_to_ptr.vmem [resolvable:$true] %s378
          %384 = dma.hbm_to_vmem [thread:$0]  %s3, 256, %s379, [#allocation9], 64, 64, 4
        $region24: #{tpu_custom_call.1} parent=11 // pred_fallthru
          _
        // Predicated region
        $region25: #{tpu_custom_call.1} parent=11 // pred_check
          %p385 = pneg %p141
        $region26: #{tpu_custom_call.1} parent=11 // pred_check_branch
          %387 = sbr.rel (%p385) target = $region28
        $region27: #{tpu_custom_call.1} parent=11 // pred_region
          %s389 = ssub.s32 16, 16
          %390 = vsyncadd [#allocation9], %s389
          %s392 = sshll.u32 [#allocation10], 4
          %s393 = int_to_ptr.vmem [resolvable:$true] %s392
          %395 = dma.hbm_to_vmem [thread:$0]  %s4, 16, %s393, [#allocation9]
        $region28: #{tpu_custom_call.1} parent=11 // pred_fallthru
          _
        // Predicated region
        $region29: #{tpu_custom_call.1} parent=11 // pred_check
          %p396 = pneg %p162
        $region30: #{tpu_custom_call.1} parent=11 // pred_check_branch
          %398 = sbr.rel (%p396) target = $region32
        $region31: #{tpu_custom_call.1} parent=11 // pred_region
          %s400 = ssub.s32 256, 256
          %401 = vsyncadd [#allocation12], %s400
          %s402 = sshll.u32 [#allocation11], 4
          %s403 = int_to_ptr.vmem [resolvable:$true] %s402
          %408 = dma.hbm_to_vmem [thread:$0]  %s5, 256, %s403, [#allocation12], 64, 64, 4
        $region32: #{tpu_custom_call.1} parent=11 // pred_fallthru
          _
        // Predicated region
        $region33: #{tpu_custom_call.1} parent=11 // pred_check
          %p409 = pneg %p183
        $region34: #{tpu_custom_call.1} parent=11 // pred_check_branch
          %411 = sbr.rel (%p409) target = $region36
        $region35: #{tpu_custom_call.1} parent=11 // pred_region
          %s413 = ssub.s32 16, 16
          %414 = vsyncadd [#allocation12], %s413
          %s416 = sshll.u32 [#allocation13], 4
          %s417 = int_to_ptr.vmem [resolvable:$true] %s416
          %419 = dma.hbm_to_vmem [thread:$0]  %s6, 16, %s417, [#allocation12]
        $region36: #{tpu_custom_call.1} parent=11 // pred_fallthru
          _
        // Predicated region
        $region37: #{tpu_custom_call.1} parent=11 // pred_check
          %p420 = pneg %p204
        $region38: #{tpu_custom_call.1} parent=11 // pred_check_branch
          %422 = sbr.rel (%p420) target = $region40
        $region39: #{tpu_custom_call.1} parent=11 // pred_region
          %s424 = ssub.s32 16, 16
          %425 = vsyncadd [#allocation15], %s424
          %s427 = sshll.u32 [#allocation14], 4
          %s428 = int_to_ptr.vmem [resolvable:$true] %s427
          %430 = dma.hbm_to_vmem [thread:$0]  %s7, 16, %s428, [#allocation15]
        $region40: #{tpu_custom_call.1} parent=11 // pred_fallthru
          _
        // Predicated region
        $region41: #{tpu_custom_call.1} parent=11 // pred_check
          %p431 = pneg %p225
        $region42: #{tpu_custom_call.1} parent=11 // pred_check_branch
          %433 = sbr.rel (%p431) target = $region44
        $region43: #{tpu_custom_call.1} parent=11 // pred_region
          %s435 = ssub.s32 16, 16
          %436 = vsyncadd [#allocation15], %s435
          %s438 = sshll.u32 [#allocation16], 4
          %s439 = int_to_ptr.vmem [resolvable:$true] %s438
          %441 = dma.hbm_to_vmem [thread:$0]  %s8, 16, %s439, [#allocation15]
        $region44: #{tpu_custom_call.1} parent=11 // pred_fallthru
          _
        // Predicated region
        $region45: #{tpu_custom_call.1} parent=11 // pred_check
          %p442 = pneg %p246
        $region46: #{tpu_custom_call.1} parent=11 // pred_check_branch
          %444 = sbr.rel (%p442) target = $region48
        $region47: #{tpu_custom_call.1} parent=11 // pred_region
          %s446 = ssub.s32 256, 256
          %447 = vsyncadd [#allocation18], %s446
          %s448 = sshll.u32 [#allocation17], 4
          %s449 = int_to_ptr.vmem [resolvable:$true] %s448
          %454 = dma.hbm_to_vmem [thread:$0]  %s9, 256, %s449, [#allocation18], 64, 64, 4
        $region48: #{tpu_custom_call.1} parent=11 // pred_fallthru
          _
        // Predicated region
        $region49: #{tpu_custom_call.1} parent=11 // pred_check
          %p455 = pneg %p267
        $region50: #{tpu_custom_call.1} parent=11 // pred_check_branch
          %457 = sbr.rel (%p455) target = $region52
        $region51: #{tpu_custom_call.1} parent=11 // pred_region
          %s459 = ssub.s32 16, 16
          %460 = vsyncadd [#allocation18], %s459
          %s462 = sshll.u32 [#allocation19], 4
          %s463 = int_to_ptr.vmem [resolvable:$true] %s462
          %465 = dma.hbm_to_vmem [thread:$0]  %s10, 16, %s463, [#allocation18]
        $region52: #{tpu_custom_call.1} parent=11 // pred_fallthru
          _
        // Predicated region
        $region53: #{tpu_custom_call.1} parent=11 // pred_check
          %p466 = pneg %p288
        $region54: #{tpu_custom_call.1} parent=11 // pred_check_branch
          %468 = sbr.rel (%p466) target = $region56
        $region55: #{tpu_custom_call.1} parent=11 // pred_region
          %s470 = ssub.s32 1024, 1024
          %471 = vsyncadd [#allocation21], %s470
          %s472 = sshll.u32 [#allocation20], 4
          %s473 = int_to_ptr.vmem [resolvable:$true] %s472
          %478 = dma.hbm_to_vmem [thread:$0]  %s11, 1024, %s473, [#allocation21], 64, 64, 4
        $region56: #{tpu_custom_call.1} parent=11 // pred_fallthru
          _
        // Predicated region
        $region57: #{tpu_custom_call.1} parent=11 // pred_check
          %p479 = pneg %p309
        $region58: #{tpu_custom_call.1} parent=11 // pred_check_branch
          %481 = sbr.rel (%p479) target = $region60
        $region59: #{tpu_custom_call.1} parent=11 // pred_region
          %s483 = ssub.s32 16, 16
          %484 = vsyncadd [#allocation21], %s483
          %s486 = sshll.u32 [#allocation22], 4
          %s487 = int_to_ptr.vmem [resolvable:$true] %s486
          %489 = dma.hbm_to_vmem [thread:$0]  %s12, 16, %s487, [#allocation21]
        $region60: #{tpu_custom_call.1} parent=11 // pred_fallthru
          _
      $region12: #{tpu_custom_call.1} parent=5 // pred_fallthru
        _
      %p490 = scmp.lt.s32.totalorder %s31, 2
      // Predicated region
      $region61: #{tpu_custom_call.1} parent=5 // pred_check
        %p491 = pneg %p490
      $region62: #{tpu_custom_call.1} parent=5 // pred_check_branch
        %493 = sbr.rel (%p491) target = $region64
      $region63: #{tpu_custom_call.1} parent=5 // pred_region
        // Predicated region
        $region65: #{tpu_custom_call.1} parent=63 // pred_check
          %p494 = pneg %p51
        $region66: #{tpu_custom_call.1} parent=63 // pred_check_branch
          %496 = sbr.rel (%p494) target = $region68
        $region67: #{tpu_custom_call.1} parent=63 // pred_region
          %s497 = sand.u32 %s41, 1
          %s498 = scalar_lea.sflag [#allocation3], %s497
          %s499 = sand.u32 %s41, 1
          %s500 = smul.addr %s499, 8
          %s501 = scalar_lea.vmem [#allocation2], %s500
          %s503 = ssub.s32 128, 128
          %504 = vsyncadd %s498, %s503
          %s505 = smul.addr %s31, 128
          %s506 = scalar_lea.hbm %s0, %s505
          %s508 = sshll.u32 %s501, 4
          %s509 = int_to_ptr.vmem [resolvable:$true] %s508
          %511 = dma.hbm_to_vmem [thread:$0]  %s506, 128, %s509, %s498
        $region68: #{tpu_custom_call.1} parent=63 // pred_fallthru
          _
      $region64: #{tpu_custom_call.1} parent=5 // pred_fallthru
        _
      %p512 = scmp.le.s32.totalorder 1, %s31
      %p513 = scmp.lt.s32.totalorder %s31, 3
      %p514 = pnand %p512, %p513
      %p515 = pneg %p514
      // Predicated region
      $region69: #{tpu_custom_call.1} parent=5 // pred_check
        _
      $region70: #{tpu_custom_call.1} parent=5 // pred_check_branch
        %517 = sbr.rel (%p514) target = $region72
      $region71: #{tpu_custom_call.1} parent=5 // pred_region
        %s518 = ssub.s32 %s31, 1
        %s519 = sand.u32 %s44, 1
        %s520 = scalar_lea.sflag [#allocation3], %s519
        %s521 = sand.u32 %s44, 1
        %s522 = smul.addr %s521, 8
        %s523 = scalar_lea.vmem [#allocation2], %s522
        // Predicated region
        $region73: #{tpu_custom_call.1} parent=71 // pred_check
          %p524 = pneg %p57
        $region74: #{tpu_custom_call.1} parent=71 // pred_check_branch
          %526 = sbr.rel (%p524) target = $region76
        $region75: #{tpu_custom_call.1} parent=71 // pred_region
          %527 = dma.done %s520, 128
        $region76: #{tpu_custom_call.1} parent=71 // pred_fallthru
          _
        // Predicated region
        $region77: #{tpu_custom_call.1} parent=71 // pred_check
          %p528 = pneg %p78
        $region78: #{tpu_custom_call.1} parent=71 // pred_check_branch
          %530 = sbr.rel (%p528) target = $region80
        $region79: #{tpu_custom_call.1} parent=71 // pred_region
          %531 = dma.done [#allocation6], 16
        $region80: #{tpu_custom_call.1} parent=71 // pred_fallthru
          _
        // Predicated region
        $region81: #{tpu_custom_call.1} parent=71 // pred_check
          %p532 = pneg %p99
        $region82: #{tpu_custom_call.1} parent=71 // pred_check_branch
          %534 = sbr.rel (%p532) target = $region84
        $region83: #{tpu_custom_call.1} parent=71 // pred_region
          %535 = dma.done [#allocation6], 16
        $region84: #{tpu_custom_call.1} parent=71 // pred_fallthru
          _
        // Predicated region
        $region85: #{tpu_custom_call.1} parent=71 // pred_check
          %p536 = pneg %p120
        $region86: #{tpu_custom_call.1} parent=71 // pred_check_branch
          %538 = sbr.rel (%p536) target = $region88
        $region87: #{tpu_custom_call.1} parent=71 // pred_region
          %539 = dma.done [#allocation9], 256
        $region88: #{tpu_custom_call.1} parent=71 // pred_fallthru
          _
        // Predicated region
        $region89: #{tpu_custom_call.1} parent=71 // pred_check
          %p540 = pneg %p141
        $region90: #{tpu_custom_call.1} parent=71 // pred_check_branch
          %542 = sbr.rel (%p540) target = $region92
        $region91: #{tpu_custom_call.1} parent=71 // pred_region
          %543 = dma.done [#allocation9], 16
        $region92: #{tpu_custom_call.1} parent=71 // pred_fallthru
          _
        // Predicated region
        $region93: #{tpu_custom_call.1} parent=71 // pred_check
          %p544 = pneg %p162
        $region94: #{tpu_custom_call.1} parent=71 // pred_check_branch
          %546 = sbr.rel (%p544) target = $region96
        $region95: #{tpu_custom_call.1} parent=71 // pred_region
          %547 = dma.done [#allocation12], 256
        $region96: #{tpu_custom_call.1} parent=71 // pred_fallthru
          _
        // Predicated region
        $region97: #{tpu_custom_call.1} parent=71 // pred_check
          %p548 = pneg %p183
        $region98: #{tpu_custom_call.1} parent=71 // pred_check_branch
          %550 = sbr.rel (%p548) target = $region100
        $region99: #{tpu_custom_call.1} parent=71 // pred_region
          %551 = dma.done [#allocation12], 16
        $region100: #{tpu_custom_call.1} parent=71 // pred_fallthru
          _
        // Predicated region
        $region101: #{tpu_custom_call.1} parent=71 // pred_check
          %p552 = pneg %p204
        $region102: #{tpu_custom_call.1} parent=71 // pred_check_branch
          %554 = sbr.rel (%p552) target = $region104
        $region103: #{tpu_custom_call.1} parent=71 // pred_region
          %555 = dma.done [#allocation15], 16
        $region104: #{tpu_custom_call.1} parent=71 // pred_fallthru
          _
        // Predicated region
        $region105: #{tpu_custom_call.1} parent=71 // pred_check
          %p556 = pneg %p225
        $region106: #{tpu_custom_call.1} parent=71 // pred_check_branch
          %558 = sbr.rel (%p556) target = $region108
        $region107: #{tpu_custom_call.1} parent=71 // pred_region
          %559 = dma.done [#allocation15], 16
        $region108: #{tpu_custom_call.1} parent=71 // pred_fallthru
          _
        // Predicated region
        $region109: #{tpu_custom_call.1} parent=71 // pred_check
          %p560 = pneg %p246
        $region110: #{tpu_custom_call.1} parent=71 // pred_check_branch
          %562 = sbr.rel (%p560) target = $region112
        $region111: #{tpu_custom_call.1} parent=71 // pred_region
          %563 = dma.done [#allocation18], 256
        $region112: #{tpu_custom_call.1} parent=71 // pred_fallthru
          _
        // Predicated region
        $region113: #{tpu_custom_call.1} parent=71 // pred_check
          %p564 = pneg %p267
        $region114: #{tpu_custom_call.1} parent=71 // pred_check_branch
          %566 = sbr.rel (%p564) target = $region116
        $region115: #{tpu_custom_call.1} parent=71 // pred_region
          %567 = dma.done [#allocation18], 16
        $region116: #{tpu_custom_call.1} parent=71 // pred_fallthru
          _
        // Predicated region
        $region117: #{tpu_custom_call.1} parent=71 // pred_check
          %p568 = pneg %p288
        $region118: #{tpu_custom_call.1} parent=71 // pred_check_branch
          %570 = sbr.rel (%p568) target = $region120
        $region119: #{tpu_custom_call.1} parent=71 // pred_region
          %571 = dma.done [#allocation21], 1024
        $region120: #{tpu_custom_call.1} parent=71 // pred_fallthru
          _
        // Predicated region
        $region121: #{tpu_custom_call.1} parent=71 // pred_check
          %p572 = pneg %p309
        $region122: #{tpu_custom_call.1} parent=71 // pred_check_branch
          %574 = sbr.rel (%p572) target = $region124
        $region123: #{tpu_custom_call.1} parent=71 // pred_region
          %575 = dma.done [#allocation21], 16
        $region124: #{tpu_custom_call.1} parent=71 // pred_fallthru
          _
        %s576 = sand.u32 %s44, 1
        %s577 = scalar_lea.sflag [#allocation3], %s576
        %s578 = sand.u32 %s44, 1
        %s579 = smul.addr %s578, 8
        %s580 = scalar_lea.vmem [#allocation2], %s579
        %p581 = pneg %p57
        %p582 = pneg %p54
        %p583 = pneg %p78
        %p584 = pneg %p75
        %p585 = pneg %p99
        %p586 = pneg %p96
        %p587 = pneg %p120
        %p588 = pneg %p117
        %p589 = pneg %p141
        %p590 = pneg %p138
        %p591 = pneg %p162
        %p592 = pneg %p159
        %p593 = pneg %p183
        %p594 = pneg %p180
        %p595 = pneg %p204
        %p596 = pneg %p201
        %p597 = pneg %p225
        %p598 = pneg %p222
        %p599 = pneg %p246
        %p600 = pneg %p243
        %p601 = pneg %p267
        %p602 = pneg %p264
        %p603 = pneg %p288
        %p604 = pneg %p285
        %p605 = pneg %p309
        %p606 = pneg %p306
        %p607 = pneg %p335
        %p608 = pneg %p332
        %s609 = sand.u32 %s322, 1
        %s610 = scalar_lea.sflag [#allocation4], %s609
        %s611 = sand.u32 %s322, 1
        %s612 = smul.addr %s611, 8
        %s613 = scalar_lea.vmem [#allocation23], %s612
        %v615 = vld [vmem:[%s523] sm:$0xff]
        %v616 = vld [vmem:[#allocation5] sm:$0x1]
        %v617 = vld [vmem:[#allocation7] sm:$0x1]
        %vm618 = vcmask 261120
        %v619 = vsel %vm618, %v615, 0.0
        %620 = vadd.xlane.f32.xlu0 %v619
        %v621 = vpop.xlane.xlu0 %620
        %v622 = vrcp.pop 32.0
        %v623 = vmul.f32 %v621, %v622
        %v624 = vsub.f32 %v615, %v623
        %v625 = vmul.f32 %v624, %v624
        %v626 = vsel %vm618, %v625, 0.0
        %627 = vadd.xlane.f32.xlu0 %v626
        %v628 = vpop.xlane.xlu0 %627
        %v629 = vmul.f32 %v628, %v622
        %v630 = vadd.f32 %v629, 1e-05
        %v631 = vrsqrt.pop %v630
        %v632 = vmul.f32 %v624, %v631
        %v634 = vlaneseq
        %v635 = vshrl.u32 %v634, 7
        %v636 = vsub.s32 0, %v635
        %v637 = vrot.slane %v616, %v636
        %v639 = vmul.f32 %v632, %v637
        %v641 = vlaneseq
        %v642 = vshrl.u32 %v641, 7
        %v643 = vsub.s32 0, %v642
        %v644 = vrot.slane %v617, %v643
        %v646 = vadd.f32 %v639, %v644
        %v647 = vpack.c.bf16 %v646, %v646
        %v648 = vld [vmem:[#allocation8] sm:$0xf]
        %v649 = vld [vmem:[#allocation8 + $0x4] sm:$0xf]
        %v650 = vld [vmem:[#allocation8 + $0x8] sm:$0xf]
        %v651 = vld [vmem:[#allocation8 + $0xc] sm:$0xf]
        %v652 = vld [vmem:[#allocation10] sm:$0x1]
        %v654 = vlaneseq
        %v655 = vshrl.u32 %v654, 7
        %v656 = vsub.s32 0, %v655
        %v657 = vrot.slane %v652, %v656
        %v663 = vunpack.c.l.b16 %v648
        %v664 = vunpack.c.l.b16 %v649
        %v665 = vunpack.c.l.b16 %v650
        %v666 = vunpack.c.l.b16 %v651
        %v667 = vpack.c.b16 %v664, %v663
        %v668 = vpack.c.b16 %v666, %v665
        %v672 = vsel %vm618, %v647, 0
        %674 = vmatprep.subr.bf16.mxu0 0
        %675 = vmatpush1.bf16.msra.mxu0 %v667
        %676 = vmatprep.subr.bf16.mxu0 0
        %677 = vmatpush1.bf16.msra.mxu0 %v668
        %678 = vmatprep.subr.bf16.mxu0 0
        %679 = vmatpush1.bf16.msra.mxu0 0
        %680 = vmatprep.subr.bf16.mxu0 0
        %681 = vmatpush1.bf16.msra.mxu0 0
        %682 = vmatprep.subr.bf16.mxu0 0
        %683 = vmatpush1.bf16.msra.mxu0 0
        %684 = vmatprep.subr.bf16.mxu0 0
        %685 = vmatpush1.bf16.msra.mxu0 0
        %686 = vmatprep.subr.bf16.mxu0 0
        %687 = vmatpush1.bf16.msra.mxu0 0
        %688 = vmatprep.subr.bf16.mxu0 0
        %689 = vmatpush1.bf16.msra.mxu0 0
        %690 = vmatprep.subr.bf16.mxu0 0
        %691 = vmatpush1.bf16.msra.mxu0 0
        %692 = vmatprep.subr.bf16.mxu0 0
        %693 = vmatpush1.bf16.msra.mxu0 0
        %694 = vmatprep.subr.bf16.mxu0 0
        %695 = vmatpush1.bf16.msra.mxu0 0
        %696 = vmatprep.subr.bf16.mxu0 0
        %697 = vmatpush1.bf16.msra.mxu0 0
        %698 = vmatprep.subr.bf16.mxu0 0
        %699 = vmatpush1.bf16.msra.mxu0 0
        %700 = vmatprep.subr.bf16.mxu0 0
        %701 = vmatpush1.bf16.msra.mxu0 0
        %702 = vmatprep.subr.bf16.mxu0 0
        %703 = vmatpush1.bf16.msra.mxu0 0
        %704 = vmatprep.subr.bf16.mxu0 0
        %705 = vmatpush1.bf16.msra.mxu0 0
        %706 = vmatprep.mubr.bf16.mxu0 0
        %707 = vmatmul.mubr.bf16.gmra.mrb[0].mxu0 %v672
        %v708 = vpop.f32.mrb[0].mxu0
        %v709 = vadd.f32 %v657, %v708
        %v710 = vpop.f32.mrb[0].mxu0
        %v711 = vpop.f32.mrb[0].mxu0
        %v712 = vpop.f32.mrb[0].mxu0
        %713 = vdwg.mxu0
        %v714 = vpack.c.bf16 %v709, %v709
        %716 = vrot.lane.b32.xlu0 %v714, 120
        %v717 = vpop.permute.xlu0 %716
        %718 = vrot.lane.b32.xlu0 %v714, 112
        %v719 = vpop.permute.xlu0 %718
        %720 = vrot.lane.b32.xlu0 %v714, 104
        %v721 = vpop.permute.xlu0 %720
        %v723 = vunpack.c.l.s4 1983009808
        %v724 = vunpack.c.0.s8 %v723
        %v725 = vlaneseq
        %v726 = vshrl.u32 %v725, 7
        %v727 = vsub.s32 %v724, %v726
        %v728 = vrot.slane %v714, %v727
        %v731 = vunpack.c.l.s4 1983009808
        %v732 = vunpack.c.0.s8 %v731
        %v733 = vlaneseq
        %v734 = vshrl.u32 %v733, 7
        %v735 = vsub.s32 %v732, %v734
        %v736 = vrot.slane %v719, %v735
        %v737 = vcombine.low %v728, %v736
        %v738 = vcombine.high %v728, %v736
        %v740 = vunpack.c.l.s4 1934713408
        %v741 = vunpack.c.0.s8 %v740
        %v742 = vlaneseq
        %v743 = vshrl.u32 %v742, 7
        %v744 = vsub.s32 %v741, %v743
        %v745 = vrot.slane %v737, %v744
        %v747 = vunpack.c.l.s4 1934713408
        %v748 = vunpack.c.0.s8 %v747
        %v749 = vlaneseq
        %v750 = vshrl.u32 %v749, 7
        %v751 = vsub.s32 %v748, %v750
        %v752 = vrot.slane %v738, %v751
        %v753 = vcombine.high %v745, 0
        %v754 = vcombine.high %v752, 0
        %v757 = vunpack.c.l.s4 1983009808
        %v758 = vunpack.c.0.s8 %v757
        %v759 = vlaneseq
        %v760 = vshrl.u32 %v759, 7
        %v761 = vsub.s32 %v758, %v760
        %v762 = vrot.slane %v717, %v761
        %v765 = vunpack.c.l.s4 1983009808
        %v766 = vunpack.c.0.s8 %v765
        %v767 = vlaneseq
        %v768 = vshrl.u32 %v767, 7
        %v769 = vsub.s32 %v766, %v768
        %v770 = vrot.slane %v721, %v769
        %v771 = vcombine.low %v762, %v770
        %v772 = vcombine.high %v762, %v770
        %v774 = vunpack.c.l.s4 1934713408
        %v775 = vunpack.c.0.s8 %v774
        %v776 = vlaneseq
        %v777 = vshrl.u32 %v776, 7
        %v778 = vsub.s32 %v775, %v777
        %v779 = vrot.slane %v771, %v778
        %v781 = vunpack.c.l.s4 1934713408
        %v782 = vunpack.c.0.s8 %v781
        %v783 = vlaneseq
        %v784 = vshrl.u32 %v783, 7
        %v785 = vsub.s32 %v782, %v784
        %v786 = vrot.slane %v772, %v785
        %v787 = vcombine.high %v779, 0
        %v788 = vcombine.high %v786, 0
        %v791 = vpack.i.b16 %v779, %v745
        %v793 = vshrl.u32 %v745, 16
        %v794 = vshrl.u32 %v779, 16
        %v795 = vpack.i.b16 %v794, %v793
        %v799 = vpack.i.b16 %v787, %v753
        %v801 = vshrl.u32 %v753, 16
        %v802 = vshrl.u32 %v787, 16
        %v803 = vpack.i.b16 %v802, %v801
        %v807 = vpack.i.b16 %v786, %v752
        %v809 = vshrl.u32 %v752, 16
        %v810 = vshrl.u32 %v786, 16
        %v811 = vpack.i.b16 %v810, %v809
        %v815 = vpack.i.b16 %v788, %v754
        %v817 = vshrl.u32 %v754, 16
        %v818 = vshrl.u32 %v788, 16
        %v819 = vpack.i.b16 %v818, %v817
        %v821 = vcombine.low %v791, %v807
        %v823 = vunpack.c.l.s4 1983009808
        %v824 = vunpack.c.0.s8 %v823
        %v825 = vlaneseq
        %v826 = vshrl.u32 %v825, 7
        %v827 = vsub.s32 %v824, %v826
        %v828 = vrot.slane %v821, %v827
        %v829 = vcombine.low %v799, %v815
        %v831 = vunpack.c.l.s4 1983009808
        %v832 = vunpack.c.0.s8 %v831
        %v833 = vlaneseq
        %v834 = vshrl.u32 %v833, 7
        %v835 = vsub.s32 %v832, %v834
        %v836 = vrot.slane %v829, %v835
        %v837 = vcombine.low %v828, %v836
        %v839 = vunpack.c.l.s4 1934713408
        %v840 = vunpack.c.0.s8 %v839
        %v841 = vlaneseq
        %v842 = vshrl.u32 %v841, 7
        %v843 = vsub.s32 %v840, %v842
        %v844 = vrot.slane %v837, %v843
        %v845 = vcombine.high %v844, 0
        %v846 = vcombine.low %v795, %v811
        %v848 = vunpack.c.l.s4 1983009808
        %v849 = vunpack.c.0.s8 %v848
        %v850 = vlaneseq
        %v851 = vshrl.u32 %v850, 7
        %v852 = vsub.s32 %v849, %v851
        %v853 = vrot.slane %v846, %v852
        %v854 = vcombine.low %v803, %v819
        %v856 = vunpack.c.l.s4 1983009808
        %v857 = vunpack.c.0.s8 %v856
        %v858 = vlaneseq
        %v859 = vshrl.u32 %v858, 7
        %v860 = vsub.s32 %v857, %v859
        %v861 = vrot.slane %v854, %v860
        %v862 = vcombine.low %v853, %v861
        %v864 = vunpack.c.l.s4 1934713408
        %v865 = vunpack.c.0.s8 %v864
        %v866 = vlaneseq
        %v867 = vshrl.u32 %v866, 7
        %v868 = vsub.s32 %v865, %v867
        %v869 = vrot.slane %v862, %v868
        %v870 = vcombine.high %v869, 0
        %v873 = vpack.i.b16 %v869, %v844
        %v874 = vshrl.u32 %v844, 16
        %v875 = vshrl.u32 %v869, 16
        %v876 = vpack.i.b16 %v875, %v874
        %v879 = vpack.i.b16 %v870, %v845
        %v880 = vshrl.u32 %v845, 16
        %v881 = vshrl.u32 %v870, 16
        %v882 = vpack.i.b16 %v881, %v880
        %883 = vrot.lane.b32.xlu0 %v714, 96
        %v884 = vpop.permute.xlu0 %883
        %885 = vrot.lane.b32.xlu0 %v717, 96
        %v886 = vpop.permute.xlu0 %885
        %887 = vrot.lane.b32.xlu0 %v719, 96
        %v888 = vpop.permute.xlu0 %887
        %889 = vrot.lane.b32.xlu0 %v721, 96
        %v890 = vpop.permute.xlu0 %889
        %v893 = vunpack.c.l.s4 1983009808
        %v894 = vunpack.c.0.s8 %v893
        %v895 = vlaneseq
        %v896 = vshrl.u32 %v895, 7
        %v897 = vsub.s32 %v894, %v896
        %v898 = vrot.slane %v884, %v897
        %v901 = vunpack.c.l.s4 1983009808
        %v902 = vunpack.c.0.s8 %v901
        %v903 = vlaneseq
        %v904 = vshrl.u32 %v903, 7
        %v905 = vsub.s32 %v902, %v904
        %v906 = vrot.slane %v888, %v905
        %v907 = vcombine.low %v898, %v906
        %v908 = vcombine.high %v898, %v906
        %v910 = vunpack.c.l.s4 1934713408
        %v911 = vunpack.c.0.s8 %v910
        %v912 = vlaneseq
        %v913 = vshrl.u32 %v912, 7
        %v914 = vsub.s32 %v911, %v913
        %v915 = vrot.slane %v907, %v914
        %v917 = vunpack.c.l.s4 1934713408
        %v918 = vunpack.c.0.s8 %v917
        %v919 = vlaneseq
        %v920 = vshrl.u32 %v919, 7
        %v921 = vsub.s32 %v918, %v920
        %v922 = vrot.slane %v908, %v921
        %v923 = vcombine.high %v915, 0
        %v924 = vcombine.high %v922, 0
        %v927 = vunpack.c.l.s4 1983009808
        %v928 = vunpack.c.0.s8 %v927
        %v929 = vlaneseq
        %v930 = vshrl.u32 %v929, 7
        %v931 = vsub.s32 %v928, %v930
        %v932 = vrot.slane %v886, %v931
        %v935 = vunpack.c.l.s4 1983009808
        %v936 = vunpack.c.0.s8 %v935
        %v937 = vlaneseq
        %v938 = vshrl.u32 %v937, 7
        %v939 = vsub.s32 %v936, %v938
        %v940 = vrot.slane %v890, %v939
        %v941 = vcombine.low %v932, %v940
        %v942 = vcombine.high %v932, %v940
        %v944 = vunpack.c.l.s4 1934713408
        %v945 = vunpack.c.0.s8 %v944
        %v946 = vlaneseq
        %v947 = vshrl.u32 %v946, 7
        %v948 = vsub.s32 %v945, %v947
        %v949 = vrot.slane %v941, %v948
        %v951 = vunpack.c.l.s4 1934713408
        %v952 = vunpack.c.0.s8 %v951
        %v953 = vlaneseq
        %v954 = vshrl.u32 %v953, 7
        %v955 = vsub.s32 %v952, %v954
        %v956 = vrot.slane %v942, %v955
        %v957 = vcombine.high %v949, 0
        %v958 = vcombine.high %v956, 0
        %v961 = vpack.i.b16 %v949, %v915
        %v963 = vshrl.u32 %v915, 16
        %v964 = vshrl.u32 %v949, 16
        %v965 = vpack.i.b16 %v964, %v963
        %v969 = vpack.i.b16 %v957, %v923
        %v971 = vshrl.u32 %v923, 16
        %v972 = vshrl.u32 %v957, 16
        %v973 = vpack.i.b16 %v972, %v971
        %v977 = vpack.i.b16 %v956, %v922
        %v979 = vshrl.u32 %v922, 16
        %v980 = vshrl.u32 %v956, 16
        %v981 = vpack.i.b16 %v980, %v979
        %v985 = vpack.i.b16 %v958, %v924
        %v987 = vshrl.u32 %v924, 16
        %v988 = vshrl.u32 %v958, 16
        %v989 = vpack.i.b16 %v988, %v987
        %v991 = vcombine.low %v961, %v977
        %v993 = vunpack.c.l.s4 1983009808
        %v994 = vunpack.c.0.s8 %v993
        %v995 = vlaneseq
        %v996 = vshrl.u32 %v995, 7
        %v997 = vsub.s32 %v994, %v996
        %v998 = vrot.slane %v991, %v997
        %v999 = vcombine.low %v969, %v985
        %v1001 = vunpack.c.l.s4 1983009808
        %v1002 = vunpack.c.0.s8 %v1001
        %v1003 = vlaneseq
        %v1004 = vshrl.u32 %v1003, 7
        %v1005 = vsub.s32 %v1002, %v1004
        %v1006 = vrot.slane %v999, %v1005
        %v1007 = vcombine.low %v998, %v1006
        %v1009 = vunpack.c.l.s4 1934713408
        %v1010 = vunpack.c.0.s8 %v1009
        %v1011 = vlaneseq
        %v1012 = vshrl.u32 %v1011, 7
        %v1013 = vsub.s32 %v1010, %v1012
        %v1014 = vrot.slane %v1007, %v1013
        %v1015 = vcombine.high %v1014, 0
        %v1016 = vcombine.low %v965, %v981
        %v1018 = vunpack.c.l.s4 1983009808
        %v1019 = vunpack.c.0.s8 %v1018
        %v1020 = vlaneseq
        %v1021 = vshrl.u32 %v1020, 7
        %v1022 = vsub.s32 %v1019, %v1021
        %v1023 = vrot.slane %v1016, %v1022
        %v1024 = vcombine.low %v973, %v989
        %v1026 = vunpack.c.l.s4 1983009808
        %v1027 = vunpack.c.0.s8 %v1026
        %v1028 = vlaneseq
        %v1029 = vshrl.u32 %v1028, 7
        %v1030 = vsub.s32 %v1027, %v1029
        %v1031 = vrot.slane %v1024, %v1030
        %v1032 = vcombine.low %v1023, %v1031
        %v1034 = vunpack.c.l.s4 1934713408
        %v1035 = vunpack.c.0.s8 %v1034
        %v1036 = vlaneseq
        %v1037 = vshrl.u32 %v1036, 7
        %v1038 = vsub.s32 %v1035, %v1037
        %v1039 = vrot.slane %v1032, %v1038
        %v1040 = vcombine.high %v1039, 0
        %v1043 = vpack.i.b16 %v1039, %v1014
        %v1044 = vshrl.u32 %v1014, 16
        %v1045 = vshrl.u32 %v1039, 16
        %v1046 = vpack.i.b16 %v1045, %v1044
        %v1049 = vpack.i.b16 %v1040, %v1015
        %v1050 = vshrl.u32 %v1015, 16
        %v1051 = vshrl.u32 %v1040, 16
        %v1052 = vpack.i.b16 %v1051, %v1050
        %1053 = vrot.lane.b32.xlu0 %v714, 64
        %v1054 = vpop.permute.xlu0 %1053
        %1055 = vrot.lane.b32.xlu0 %v717, 64
        %v1056 = vpop.permute.xlu0 %1055
        %1057 = vrot.lane.b32.xlu0 %v719, 64
        %v1058 = vpop.permute.xlu0 %1057
        %1059 = vrot.lane.b32.xlu0 %v721, 64
        %v1060 = vpop.permute.xlu0 %1059
        %v1063 = vunpack.c.l.s4 1983009808
        %v1064 = vunpack.c.0.s8 %v1063
        %v1065 = vlaneseq
        %v1066 = vshrl.u32 %v1065, 7
        %v1067 = vsub.s32 %v1064, %v1066
        %v1068 = vrot.slane %v1054, %v1067
        %v1071 = vunpack.c.l.s4 1983009808
        %v1072 = vunpack.c.0.s8 %v1071
        %v1073 = vlaneseq
        %v1074 = vshrl.u32 %v1073, 7
        %v1075 = vsub.s32 %v1072, %v1074
        %v1076 = vrot.slane %v1058, %v1075
        %v1077 = vcombine.low %v1068, %v1076
        %v1078 = vcombine.high %v1068, %v1076
        %v1080 = vunpack.c.l.s4 1934713408
        %v1081 = vunpack.c.0.s8 %v1080
        %v1082 = vlaneseq
        %v1083 = vshrl.u32 %v1082, 7
        %v1084 = vsub.s32 %v1081, %v1083
        %v1085 = vrot.slane %v1077, %v1084
        %v1087 = vunpack.c.l.s4 1934713408
        %v1088 = vunpack.c.0.s8 %v1087
        %v1089 = vlaneseq
        %v1090 = vshrl.u32 %v1089, 7
        %v1091 = vsub.s32 %v1088, %v1090
        %v1092 = vrot.slane %v1078, %v1091
        %v1093 = vcombine.high %v1085, 0
        %v1094 = vcombine.high %v1092, 0
        %v1097 = vunpack.c.l.s4 1983009808
        %v1098 = vunpack.c.0.s8 %v1097
        %v1099 = vlaneseq
        %v1100 = vshrl.u32 %v1099, 7
        %v1101 = vsub.s32 %v1098, %v1100
        %v1102 = vrot.slane %v1056, %v1101
        %v1105 = vunpack.c.l.s4 1983009808
        %v1106 = vunpack.c.0.s8 %v1105
        %v1107 = vlaneseq
        %v1108 = vshrl.u32 %v1107, 7
        %v1109 = vsub.s32 %v1106, %v1108
        %v1110 = vrot.slane %v1060, %v1109
        %v1111 = vcombine.low %v1102, %v1110
        %v1112 = vcombine.high %v1102, %v1110
        %v1114 = vunpack.c.l.s4 1934713408
        %v1115 = vunpack.c.0.s8 %v1114
        %v1116 = vlaneseq
        %v1117 = vshrl.u32 %v1116, 7
        %v1118 = vsub.s32 %v1115, %v1117
        %v1119 = vrot.slane %v1111, %v1118
        %v1121 = vunpack.c.l.s4 1934713408
        %v1122 = vunpack.c.0.s8 %v1121
        %v1123 = vlaneseq
        %v1124 = vshrl.u32 %v1123, 7
        %v1125 = vsub.s32 %v1122, %v1124
        %v1126 = vrot.slane %v1112, %v1125
        %v1127 = vcombine.high %v1119, 0
        %v1128 = vcombine.high %v1126, 0
        %v1131 = vpack.i.b16 %v1119, %v1085
        %v1133 = vshrl.u32 %v1085, 16
        %v1134 = vshrl.u32 %v1119, 16
        %v1135 = vpack.i.b16 %v1134, %v1133
        %v1139 = vpack.i.b16 %v1127, %v1093
        %v1141 = vshrl.u32 %v1093, 16
        %v1142 = vshrl.u32 %v1127, 16
        %v1143 = vpack.i.b16 %v1142, %v1141
        %v1147 = vpack.i.b16 %v1126, %v1092
        %v1149 = vshrl.u32 %v1092, 16
        %v1150 = vshrl.u32 %v1126, 16
        %v1151 = vpack.i.b16 %v1150, %v1149
        %v1155 = vpack.i.b16 %v1128, %v1094
        %v1157 = vshrl.u32 %v1094, 16
        %v1158 = vshrl.u32 %v1128, 16
        %v1159 = vpack.i.b16 %v1158, %v1157
        %v1161 = vcombine.low %v1131, %v1147
        %v1163 = vunpack.c.l.s4 1983009808
        %v1164 = vunpack.c.0.s8 %v1163
        %v1165 = vlaneseq
        %v1166 = vshrl.u32 %v1165, 7
        %v1167 = vsub.s32 %v1164, %v1166
        %v1168 = vrot.slane %v1161, %v1167
        %v1169 = vcombine.low %v1139, %v1155
        %v1171 = vunpack.c.l.s4 1983009808
        %v1172 = vunpack.c.0.s8 %v1171
        %v1173 = vlaneseq
        %v1174 = vshrl.u32 %v1173, 7
        %v1175 = vsub.s32 %v1172, %v1174
        %v1176 = vrot.slane %v1169, %v1175
        %v1177 = vcombine.low %v1168, %v1176
        %v1179 = vunpack.c.l.s4 1934713408
        %v1180 = vunpack.c.0.s8 %v1179
        %v1181 = vlaneseq
        %v1182 = vshrl.u32 %v1181, 7
        %v1183 = vsub.s32 %v1180, %v1182
        %v1184 = vrot.slane %v1177, %v1183
        %v1185 = vcombine.high %v1184, 0
        %v1186 = vcombine.low %v1135, %v1151
        %v1188 = vunpack.c.l.s4 1983009808
        %v1189 = vunpack.c.0.s8 %v1188
        %v1190 = vlaneseq
        %v1191 = vshrl.u32 %v1190, 7
        %v1192 = vsub.s32 %v1189, %v1191
        %v1193 = vrot.slane %v1186, %v1192
        %v1194 = vcombine.low %v1143, %v1159
        %v1196 = vunpack.c.l.s4 1983009808
        %v1197 = vunpack.c.0.s8 %v1196
        %v1198 = vlaneseq
        %v1199 = vshrl.u32 %v1198, 7
        %v1200 = vsub.s32 %v1197, %v1199
        %v1201 = vrot.slane %v1194, %v1200
        %v1202 = vcombine.low %v1193, %v1201
        %v1204 = vunpack.c.l.s4 1934713408
        %v1205 = vunpack.c.0.s8 %v1204
        %v1206 = vlaneseq
        %v1207 = vshrl.u32 %v1206, 7
        %v1208 = vsub.s32 %v1205, %v1207
        %v1209 = vrot.slane %v1202, %v1208
        %v1210 = vcombine.high %v1209, 0
        %v1213 = vpack.i.b16 %v1209, %v1184
        %v1214 = vshrl.u32 %v1184, 16
        %v1215 = vshrl.u32 %v1209, 16
        %v1216 = vpack.i.b16 %v1215, %v1214
        %v1219 = vpack.i.b16 %v1210, %v1185
        %v1220 = vshrl.u32 %v1185, 16
        %v1221 = vshrl.u32 %v1210, 16
        %v1222 = vpack.i.b16 %v1221, %v1220
        %vm1223 = vcmask 64512
        %v1225 = vsel %vm1223, %v873, 0
        %v1228 = vsel %vm1223, %v1043, 0
        %1230 = vmatprep.subr.bf16.mxu0 0
        %1231 = vmatpush1.bf16.xpose.msra.mxu0 %v1228
        %1232 = vmatprep.subr.bf16.mxu0 0
        %1233 = vmatpush1.bf16.xpose.msra.mxu0 0
        %1234 = vmatprep.subr.bf16.mxu0 0
        %1235 = vmatpush1.bf16.xpose.msra.mxu0 0
        %1236 = vmatprep.subr.bf16.mxu0 0
        %1237 = vmatpush1.bf16.xpose.msra.mxu0 0
        %1238 = vmatprep.subr.bf16.mxu0 0
        %1239 = vmatpush1.bf16.xpose.msra.mxu0 0
        %1240 = vmatprep.subr.bf16.mxu0 0
        %1241 = vmatpush1.bf16.xpose.msra.mxu0 0
        %1242 = vmatprep.subr.bf16.mxu0 0
        %1243 = vmatpush1.bf16.xpose.msra.mxu0 0
        %1244 = vmatprep.subr.bf16.mxu0 0
        %1245 = vmatpush1.bf16.xpose.msra.mxu0 0
        %1246 = vmatprep.subr.bf16.mxu0 0
        %1247 = vmatpush1.bf16.xpose.msra.mxu0 0
        %1248 = vmatprep.subr.bf16.mxu0 0
        %1249 = vmatpush1.bf16.xpose.msra.mxu0 0
        %1250 = vmatprep.subr.bf16.mxu0 0
        %1251 = vmatpush1.bf16.xpose.msra.mxu0 0
        %1252 = vmatprep.subr.bf16.mxu0 0
        %1253 = vmatpush1.bf16.xpose.msra.mxu0 0
        %1254 = vmatprep.subr.bf16.mxu0 0
        %1255 = vmatpush1.bf16.xpose.msra.mxu0 0
        %1256 = vmatprep.subr.bf16.mxu0 0
        %1257 = vmatpush1.bf16.xpose.msra.mxu0 0
        %1258 = vmatprep.subr.bf16.mxu0 0
        %1259 = vmatpush1.bf16.xpose.msra.mxu0 0
        %1260 = vmatprep.subr.bf16.mxu0 0
        %1261 = vmatpush1.bf16.xpose.msra.mxu0 0
        %1262 = vmatprep.mubr.bf16.mxu0 0
        %1263 = vmatmul.mubr.bf16.gmra.mrb[0].mxu0 %v1225
        %v1264 = vpop.f32.mrb[0].mxu0
        %v1265 = vadd.f32 0.0, %v1264
        %v1266 = vpop.f32.mrb[0].mxu0
        %v1267 = vpop.f32.mrb[0].mxu0
        %v1268 = vpop.f32.mrb[0].mxu0
        %1269 = vdwg.mxu0
        %v1271 = vsel %vm1223, %v876, 0
        %v1274 = vsel %vm1223, %v1046, 0
        %1276 = vmatprep.subr.bf16.mxu0 0
        %1277 = vmatpush1.bf16.xpose.msra.mxu0 %v1274
        %1278 = vmatprep.subr.bf16.mxu0 0
        %1279 = vmatpush1.bf16.xpose.msra.mxu0 0
        %1280 = vmatprep.subr.bf16.mxu0 0
        %1281 = vmatpush1.bf16.xpose.msra.mxu0 0
        %1282 = vmatprep.subr.bf16.mxu0 0
        %1283 = vmatpush1.bf16.xpose.msra.mxu0 0
        %1284 = vmatprep.subr.bf16.mxu0 0
        %1285 = vmatpush1.bf16.xpose.msra.mxu0 0
        %1286 = vmatprep.subr.bf16.mxu0 0
        %1287 = vmatpush1.bf16.xpose.msra.mxu0 0
        %1288 = vmatprep.subr.bf16.mxu0 0
        %1289 = vmatpush1.bf16.xpose.msra.mxu0 0
        %1290 = vmatprep.subr.bf16.mxu0 0
        %1291 = vmatpush1.bf16.xpose.msra.mxu0 0
        %1292 = vmatprep.subr.bf16.mxu0 0
        %1293 = vmatpush1.bf16.xpose.msra.mxu0 0
        %1294 = vmatprep.subr.bf16.mxu0 0
        %1295 = vmatpush1.bf16.xpose.msra.mxu0 0
        %1296 = vmatprep.subr.bf16.mxu0 0
        %1297 = vmatpush1.bf16.xpose.msra.mxu0 0
        %1298 = vmatprep.subr.bf16.mxu0 0
        %1299 = vmatpush1.bf16.xpose.msra.mxu0 0
        %1300 = vmatprep.subr.bf16.mxu0 0
        %1301 = vmatpush1.bf16.xpose.msra.mxu0 0
        %1302 = vmatprep.subr.bf16.mxu0 0
        %1303 = vmatpush1.bf16.xpose.msra.mxu0 0
        %1304 = vmatprep.subr.bf16.mxu0 0
        %1305 = vmatpush1.bf16.xpose.msra.mxu0 0
        %1306 = vmatprep.subr.bf16.mxu0 0
        %1307 = vmatpush1.bf16.xpose.msra.mxu0 0
        %1308 = vmatprep.mubr.bf16.mxu0 0
        %1309 = vmatmul.mubr.bf16.gmra.mrb[0].mxu0 %v1271
        %v1310 = vpop.f32.mrb[0].mxu0
        %v1311 = vadd.f32 0.0, %v1310
        %v1312 = vpop.f32.mrb[0].mxu0
        %v1313 = vpop.f32.mrb[0].mxu0
        %v1314 = vpop.f32.mrb[0].mxu0
        %1315 = vdwg.mxu0
        %v1317 = vsel %vm1223, %v879, 0
        %v1320 = vsel %vm1223, %v1049, 0
        %1322 = vmatprep.subr.bf16.mxu0 0
        %1323 = vmatpush1.bf16.xpose.msra.mxu0 %v1320
        %1324 = vmatprep.subr.bf16.mxu0 0
        %1325 = vmatpush1.bf16.xpose.msra.mxu0 0
        %1326 = vmatprep.subr.bf16.mxu0 0
        %1327 = vmatpush1.bf16.xpose.msra.mxu0 0
        %1328 = vmatprep.subr.bf16.mxu0 0
        %1329 = vmatpush1.bf16.xpose.msra.mxu0 0
        %1330 = vmatprep.subr.bf16.mxu0 0
        %1331 = vmatpush1.bf16.xpose.msra.mxu0 0
        %1332 = vmatprep.subr.bf16.mxu0 0
        %1333 = vmatpush1.bf16.xpose.msra.mxu0 0
        %1334 = vmatprep.subr.bf16.mxu0 0
        %1335 = vmatpush1.bf16.xpose.msra.mxu0 0
        %1336 = vmatprep.subr.bf16.mxu0 0
        %1337 = vmatpush1.bf16.xpose.msra.mxu0 0
        %1338 = vmatprep.subr.bf16.mxu0 0
        %1339 = vmatpush1.bf16.xpose.msra.mxu0 0
        %1340 = vmatprep.subr.bf16.mxu0 0
        %1341 = vmatpush1.bf16.xpose.msra.mxu0 0
        %1342 = vmatprep.subr.bf16.mxu0 0
        %1343 = vmatpush1.bf16.xpose.msra.mxu0 0
        %1344 = vmatprep.subr.bf16.mxu0 0
        %1345 = vmatpush1.bf16.xpose.msra.mxu0 0
        %1346 = vmatprep.subr.bf16.mxu0 0
        %1347 = vmatpush1.bf16.xpose.msra.mxu0 0
        %1348 = vmatprep.subr.bf16.mxu0 0
        %1349 = vmatpush1.bf16.xpose.msra.mxu0 0
        %1350 = vmatprep.subr.bf16.mxu0 0
        %1351 = vmatpush1.bf16.xpose.msra.mxu0 0
        %1352 = vmatprep.subr.bf16.mxu0 0
        %1353 = vmatpush1.bf16.xpose.msra.mxu0 0
        %1354 = vmatprep.mubr.bf16.mxu0 0
        %1355 = vmatmul.mubr.bf16.gmra.mrb[0].mxu0 %v1317
        %v1356 = vpop.f32.mrb[0].mxu0
        %v1357 = vadd.f32 0.0, %v1356
        %v1358 = vpop.f32.mrb[0].mxu0
        %v1359 = vpop.f32.mrb[0].mxu0
        %v1360 = vpop.f32.mrb[0].mxu0
        %1361 = vdwg.mxu0
        %v1363 = vsel %vm1223, %v882, 0
        %v1366 = vsel %vm1223, %v1052, 0
        %1368 = vmatprep.subr.bf16.mxu0 0
        %1369 = vmatpush1.bf16.xpose.msra.mxu0 %v1366
        %1370 = vmatprep.subr.bf16.mxu0 0
        %1371 = vmatpush1.bf16.xpose.msra.mxu0 0
        %1372 = vmatprep.subr.bf16.mxu0 0
        %1373 = vmatpush1.bf16.xpose.msra.mxu0 0
        %1374 = vmatprep.subr.bf16.mxu0 0
        %1375 = vmatpush1.bf16.xpose.msra.mxu0 0
        %1376 = vmatprep.subr.bf16.mxu0 0
        %1377 = vmatpush1.bf16.xpose.msra.mxu0 0
        %1378 = vmatprep.subr.bf16.mxu0 0
        %1379 = vmatpush1.bf16.xpose.msra.mxu0 0
        %1380 = vmatprep.subr.bf16.mxu0 0
        %1381 = vmatpush1.bf16.xpose.msra.mxu0 0
        %1382 = vmatprep.subr.bf16.mxu0 0
        %1383 = vmatpush1.bf16.xpose.msra.mxu0 0
        %1384 = vmatprep.subr.bf16.mxu0 0
        %1385 = vmatpush1.bf16.xpose.msra.mxu0 0
        %1386 = vmatprep.subr.bf16.mxu0 0
        %1387 = vmatpush1.bf16.xpose.msra.mxu0 0
        %1388 = vmatprep.subr.bf16.mxu0 0
        %1389 = vmatpush1.bf16.xpose.msra.mxu0 0
        %1390 = vmatprep.subr.bf16.mxu0 0
        %1391 = vmatpush1.bf16.xpose.msra.mxu0 0
        %1392 = vmatprep.subr.bf16.mxu0 0
        %1393 = vmatpush1.bf16.xpose.msra.mxu0 0
        %1394 = vmatprep.subr.bf16.mxu0 0
        %1395 = vmatpush1.bf16.xpose.msra.mxu0 0
        %1396 = vmatprep.subr.bf16.mxu0 0
        %1397 = vmatpush1.bf16.xpose.msra.mxu0 0
        %1398 = vmatprep.subr.bf16.mxu0 0
        %1399 = vmatpush1.bf16.xpose.msra.mxu0 0
        %1400 = vmatprep.mubr.bf16.mxu0 0
        %1401 = vmatmul.mubr.bf16.gmra.mrb[0].mxu0 %v1363
        %v1402 = vpop.f32.mrb[0].mxu0
        %v1403 = vadd.f32 0.0, %v1402
        %v1404 = vpop.f32.mrb[0].mxu0
        %v1405 = vpop.f32.mrb[0].mxu0
        %v1406 = vpop.f32.mrb[0].mxu0
        %1407 = vdwg.mxu0
        %v1408 = vlaneseq
        %v1409 = vshrl.u32 %v1408, 7
        %v1410 = vlaneseq
        %v1411 = vand.u32 %v1410, 127
        %vm1412 = vcmp.gt.s32.totalorder %v1411, %v1409
        %v1413 = vsel %vm1412, 1, 0
        %vm1414 = vcmp.eq.s32.totalorder %v1413, 1
        %v1415 = vsel %vm1414, -1e+30, %v1265
        %v1416 = vsel %vm1414, -1e+30, %v1311
        %v1417 = vsel %vm1414, -1e+30, %v1357
        %v1418 = vsel %vm1414, -1e+30, %v1403
        %v1419 = vsel %vm1223, %v1415, -inf
        %1420 = vmax.xlane.f32.xlu0 %v1419
        %v1421 = vpop.xlane.xlu0 %1420
        %v1422 = vsel %vm1223, %v1416, -inf
        %1423 = vmax.xlane.f32.xlu0 %v1422
        %v1424 = vpop.xlane.xlu0 %1423
        %v1425 = vsel %vm1223, %v1417, -inf
        %1426 = vmax.xlane.f32.xlu0 %v1425
        %v1427 = vpop.xlane.xlu0 %1426
        %v1428 = vsel %vm1223, %v1418, -inf
        %1429 = vmax.xlane.f32.xlu0 %v1428
        %v1430 = vpop.xlane.xlu0 %1429
        %v1431 = vsub.f32 %v1415, %v1421
        %v1432 = vsub.f32 %v1416, %v1424
        %v1433 = vsub.f32 %v1417, %v1427
        %v1434 = vsub.f32 %v1418, %v1430
        %v1435 = vmul.f32 %v1431, 1.442695
        %v1436 = vpow.pop %v1435
        %v1437 = vmul.f32 %v1432, 1.442695
        %v1438 = vpow.pop %v1437
        %v1439 = vmul.f32 %v1433, 1.442695
        %v1440 = vpow.pop %v1439
        %v1441 = vmul.f32 %v1434, 1.442695
        %v1442 = vpow.pop %v1441
        %v1443 = vsel %vm1223, %v1436, 0.0
        %1444 = vadd.xlane.f32.xlu0 %v1443
        %v1445 = vpop.xlane.xlu0 %1444
        %v1446 = vsel %vm1223, %v1438, 0.0
        %1447 = vadd.xlane.f32.xlu0 %v1446
        %v1448 = vpop.xlane.xlu0 %1447
        %v1449 = vsel %vm1223, %v1440, 0.0
        %1450 = vadd.xlane.f32.xlu0 %v1449
        %v1451 = vpop.xlane.xlu0 %1450
        %v1452 = vsel %vm1223, %v1442, 0.0
        %1453 = vadd.xlane.f32.xlu0 %v1452
        %v1454 = vpop.xlane.xlu0 %1453
        %v1455 = vrcp.pop %v1445
        %v1456 = vrcp.pop %v1448
        %v1457 = vrcp.pop %v1451
        %v1458 = vrcp.pop %v1454
        %v1459 = vmul.f32 %v1436, %v1455
        %v1460 = vmul.f32 %v1438, %v1456
        %v1461 = vmul.f32 %v1440, %v1457
        %v1462 = vmul.f32 %v1442, %v1458
        %v1463 = vpack.c.bf16 %v1459, %v1459
        %v1464 = vpack.c.bf16 %v1460, %v1460
        %v1465 = vpack.c.bf16 %v1461, %v1461
        %v1466 = vpack.c.bf16 %v1462, %v1462
        %v1468 = vsel %vm1223, %v1463, 0
        %vm1470 = vcmask 1043456
        %v1472 = vsel %vm1470, %v1213, 0
        %1474 = vmatprep.subr.bf16.mxu0 0
        %1475 = vmatpush1.bf16.msra.mxu0 %v1472
        %1476 = vmatprep.subr.bf16.mxu0 0
        %1477 = vmatpush1.bf16.msra.mxu0 0
        %1478 = vmatprep.subr.bf16.mxu0 0
        %1479 = vmatpush1.bf16.msra.mxu0 0
        %1480 = vmatprep.subr.bf16.mxu0 0
        %1481 = vmatpush1.bf16.msra.mxu0 0
        %1482 = vmatprep.subr.bf16.mxu0 0
        %1483 = vmatpush1.bf16.msra.mxu0 0
        %1484 = vmatprep.subr.bf16.mxu0 0
        %1485 = vmatpush1.bf16.msra.mxu0 0
        %1486 = vmatprep.subr.bf16.mxu0 0
        %1487 = vmatpush1.bf16.msra.mxu0 0
        %1488 = vmatprep.subr.bf16.mxu0 0
        %1489 = vmatpush1.bf16.msra.mxu0 0
        %1490 = vmatprep.subr.bf16.mxu0 0
        %1491 = vmatpush1.bf16.msra.mxu0 0
        %1492 = vmatprep.subr.bf16.mxu0 0
        %1493 = vmatpush1.bf16.msra.mxu0 0
        %1494 = vmatprep.subr.bf16.mxu0 0
        %1495 = vmatpush1.bf16.msra.mxu0 0
        %1496 = vmatprep.subr.bf16.mxu0 0
        %1497 = vmatpush1.bf16.msra.mxu0 0
        %1498 = vmatprep.subr.bf16.mxu0 0
        %1499 = vmatpush1.bf16.msra.mxu0 0
        %1500 = vmatprep.subr.bf16.mxu0 0
        %1501 = vmatpush1.bf16.msra.mxu0 0
        %1502 = vmatprep.subr.bf16.mxu0 0
        %1503 = vmatpush1.bf16.msra.mxu0 0
        %1504 = vmatprep.subr.bf16.mxu0 0
        %1505 = vmatpush1.bf16.msra.mxu0 0
        %1506 = vmatprep.mubr.bf16.mxu0 0
        %1507 = vmatmul.mubr.bf16.gmra.mrb[0].mxu0 %v1468
        %v1508 = vpop.f32.mrb[0].mxu0
        %v1509 = vadd.f32 0.0, %v1508
        %v1510 = vpop.f32.mrb[0].mxu0
        %v1511 = vpop.f32.mrb[0].mxu0
        %v1512 = vpop.f32.mrb[0].mxu0
        %1513 = vdwg.mxu0
        %v1515 = vsel %vm1223, %v1464, 0
        %v1518 = vsel %vm1470, %v1216, 0
        %1520 = vmatprep.subr.bf16.mxu0 0
        %1521 = vmatpush1.bf16.msra.mxu0 %v1518
        %1522 = vmatprep.subr.bf16.mxu0 0
        %1523 = vmatpush1.bf16.msra.mxu0 0
        %1524 = vmatprep.subr.bf16.mxu0 0
        %1525 = vmatpush1.bf16.msra.mxu0 0
        %1526 = vmatprep.subr.bf16.mxu0 0
        %1527 = vmatpush1.bf16.msra.mxu0 0
        %1528 = vmatprep.subr.bf16.mxu0 0
        %1529 = vmatpush1.bf16.msra.mxu0 0
        %1530 = vmatprep.subr.bf16.mxu0 0
        %1531 = vmatpush1.bf16.msra.mxu0 0
        %1532 = vmatprep.subr.bf16.mxu0 0
        %1533 = vmatpush1.bf16.msra.mxu0 0
        %1534 = vmatprep.subr.bf16.mxu0 0
        %1535 = vmatpush1.bf16.msra.mxu0 0
        %1536 = vmatprep.subr.bf16.mxu0 0
        %1537 = vmatpush1.bf16.msra.mxu0 0
        %1538 = vmatprep.subr.bf16.mxu0 0
        %1539 = vmatpush1.bf16.msra.mxu0 0
        %1540 = vmatprep.subr.bf16.mxu0 0
        %1541 = vmatpush1.bf16.msra.mxu0 0
        %1542 = vmatprep.subr.bf16.mxu0 0
        %1543 = vmatpush1.bf16.msra.mxu0 0
        %1544 = vmatprep.subr.bf16.mxu0 0
        %1545 = vmatpush1.bf16.msra.mxu0 0
        %1546 = vmatprep.subr.bf16.mxu0 0
        %1547 = vmatpush1.bf16.msra.mxu0 0
        %1548 = vmatprep.subr.bf16.mxu0 0
        %1549 = vmatpush1.bf16.msra.mxu0 0
        %1550 = vmatprep.subr.bf16.mxu0 0
        %1551 = vmatpush1.bf16.msra.mxu0 0
        %1552 = vmatprep.mubr.bf16.mxu0 0
        %1553 = vmatmul.mubr.bf16.gmra.mrb[0].mxu0 %v1515
        %v1554 = vpop.f32.mrb[0].mxu0
        %v1555 = vadd.f32 0.0, %v1554
        %v1556 = vpop.f32.mrb[0].mxu0
        %v1557 = vpop.f32.mrb[0].mxu0
        %v1558 = vpop.f32.mrb[0].mxu0
        %1559 = vdwg.mxu0
        %v1561 = vsel %vm1223, %v1465, 0
        %v1564 = vsel %vm1470, %v1219, 0
        %1566 = vmatprep.subr.bf16.mxu0 0
        %1567 = vmatpush1.bf16.msra.mxu0 %v1564
        %1568 = vmatprep.subr.bf16.mxu0 0
        %1569 = vmatpush1.bf16.msra.mxu0 0
        %1570 = vmatprep.subr.bf16.mxu0 0
        %1571 = vmatpush1.bf16.msra.mxu0 0
        %1572 = vmatprep.subr.bf16.mxu0 0
        %1573 = vmatpush1.bf16.msra.mxu0 0
        %1574 = vmatprep.subr.bf16.mxu0 0
        %1575 = vmatpush1.bf16.msra.mxu0 0
        %1576 = vmatprep.subr.bf16.mxu0 0
        %1577 = vmatpush1.bf16.msra.mxu0 0
        %1578 = vmatprep.subr.bf16.mxu0 0
        %1579 = vmatpush1.bf16.msra.mxu0 0
        %1580 = vmatprep.subr.bf16.mxu0 0
        %1581 = vmatpush1.bf16.msra.mxu0 0
        %1582 = vmatprep.subr.bf16.mxu0 0
        %1583 = vmatpush1.bf16.msra.mxu0 0
        %1584 = vmatprep.subr.bf16.mxu0 0
        %1585 = vmatpush1.bf16.msra.mxu0 0
        %1586 = vmatprep.subr.bf16.mxu0 0
        %1587 = vmatpush1.bf16.msra.mxu0 0
        %1588 = vmatprep.subr.bf16.mxu0 0
        %1589 = vmatpush1.bf16.msra.mxu0 0
        %1590 = vmatprep.subr.bf16.mxu0 0
        %1591 = vmatpush1.bf16.msra.mxu0 0
        %1592 = vmatprep.subr.bf16.mxu0 0
        %1593 = vmatpush1.bf16.msra.mxu0 0
        %1594 = vmatprep.subr.bf16.mxu0 0
        %1595 = vmatpush1.bf16.msra.mxu0 0
        %1596 = vmatprep.subr.bf16.mxu0 0
        %1597 = vmatpush1.bf16.msra.mxu0 0
        %1598 = vmatprep.mubr.bf16.mxu0 0
        %1599 = vmatmul.mubr.bf16.gmra.mrb[0].mxu0 %v1561
        %v1600 = vpop.f32.mrb[0].mxu0
        %v1601 = vadd.f32 0.0, %v1600
        %v1602 = vpop.f32.mrb[0].mxu0
        %v1603 = vpop.f32.mrb[0].mxu0
        %v1604 = vpop.f32.mrb[0].mxu0
        %1605 = vdwg.mxu0
        %v1607 = vsel %vm1223, %v1466, 0
        %v1610 = vsel %vm1470, %v1222, 0
        %1612 = vmatprep.subr.bf16.mxu0 0
        %1613 = vmatpush1.bf16.msra.mxu0 %v1610
        %1614 = vmatprep.subr.bf16.mxu0 0
        %1615 = vmatpush1.bf16.msra.mxu0 0
        %1616 = vmatprep.subr.bf16.mxu0 0
        %1617 = vmatpush1.bf16.msra.mxu0 0
        %1618 = vmatprep.subr.bf16.mxu0 0
        %1619 = vmatpush1.bf16.msra.mxu0 0
        %1620 = vmatprep.subr.bf16.mxu0 0
        %1621 = vmatpush1.bf16.msra.mxu0 0
        %1622 = vmatprep.subr.bf16.mxu0 0
        %1623 = vmatpush1.bf16.msra.mxu0 0
        %1624 = vmatprep.subr.bf16.mxu0 0
        %1625 = vmatpush1.bf16.msra.mxu0 0
        %1626 = vmatprep.subr.bf16.mxu0 0
        %1627 = vmatpush1.bf16.msra.mxu0 0
        %1628 = vmatprep.subr.bf16.mxu0 0
        %1629 = vmatpush1.bf16.msra.mxu0 0
        %1630 = vmatprep.subr.bf16.mxu0 0
        %1631 = vmatpush1.bf16.msra.mxu0 0
        %1632 = vmatprep.subr.bf16.mxu0 0
        %1633 = vmatpush1.bf16.msra.mxu0 0
        %1634 = vmatprep.subr.bf16.mxu0 0
        %1635 = vmatpush1.bf16.msra.mxu0 0
        %1636 = vmatprep.subr.bf16.mxu0 0
        %1637 = vmatpush1.bf16.msra.mxu0 0
        %1638 = vmatprep.subr.bf16.mxu0 0
        %1639 = vmatpush1.bf16.msra.mxu0 0
        %1640 = vmatprep.subr.bf16.mxu0 0
        %1641 = vmatpush1.bf16.msra.mxu0 0
        %1642 = vmatprep.subr.bf16.mxu0 0
        %1643 = vmatpush1.bf16.msra.mxu0 0
        %1644 = vmatprep.mubr.bf16.mxu0 0
        %1645 = vmatmul.mubr.bf16.gmra.mrb[0].mxu0 %v1607
        %v1646 = vpop.f32.mrb[0].mxu0
        %v1647 = vadd.f32 0.0, %v1646
        %v1648 = vpop.f32.mrb[0].mxu0
        %v1649 = vpop.f32.mrb[0].mxu0
        %v1650 = vpop.f32.mrb[0].mxu0
        %1651 = vdwg.mxu0
        %v1652 = vcombine.low %v1509, %v1601
        %v1653 = vcombine.high %v1509, %v1601
        %v1655 = vunpack.c.l.s4 1983009808
        %v1656 = vunpack.c.0.s8 %v1655
        %v1657 = vlaneseq
        %v1658 = vshrl.u32 %v1657, 7
        %v1659 = vsub.s32 %v1656, %v1658
        %v1660 = vrot.slane %v1652, %v1659
        %v1662 = vunpack.c.l.s4 1983009808
        %v1663 = vunpack.c.0.s8 %v1662
        %v1664 = vlaneseq
        %v1665 = vshrl.u32 %v1664, 7
        %v1666 = vsub.s32 %v1663, %v1665
        %v1667 = vrot.slane %v1653, %v1666
        %v1668 = vcombine.low %v1555, %v1647
        %v1669 = vcombine.high %v1555, %v1647
        %v1671 = vunpack.c.l.s4 1983009808
        %v1672 = vunpack.c.0.s8 %v1671
        %v1673 = vlaneseq
        %v1674 = vshrl.u32 %v1673, 7
        %v1675 = vsub.s32 %v1672, %v1674
        %v1676 = vrot.slane %v1668, %v1675
        %v1678 = vunpack.c.l.s4 1983009808
        %v1679 = vunpack.c.0.s8 %v1678
        %v1680 = vlaneseq
        %v1681 = vshrl.u32 %v1680, 7
        %v1682 = vsub.s32 %v1679, %v1681
        %v1683 = vrot.slane %v1669, %v1682
        %v1684 = vcombine.low %v1660, %v1676
        %v1685 = vcombine.high %v1660, %v1676
        %v1687 = vunpack.c.l.s4 1934713408
        %v1688 = vunpack.c.0.s8 %v1687
        %v1689 = vlaneseq
        %v1690 = vshrl.u32 %v1689, 7
        %v1691 = vsub.s32 %v1688, %v1690
        %v1692 = vrot.slane %v1684, %v1691
        %v1694 = vunpack.c.l.s4 1934713408
        %v1695 = vunpack.c.0.s8 %v1694
        %v1696 = vlaneseq
        %v1697 = vshrl.u32 %v1696, 7
        %v1698 = vsub.s32 %v1695, %v1697
        %v1699 = vrot.slane %v1685, %v1698
        %v1700 = vcombine.low %v1667, %v1683
        %v1701 = vcombine.high %v1667, %v1683
        %v1703 = vunpack.c.l.s4 1934713408
        %v1704 = vunpack.c.0.s8 %v1703
        %v1705 = vlaneseq
        %v1706 = vshrl.u32 %v1705, 7
        %v1707 = vsub.s32 %v1704, %v1706
        %v1708 = vrot.slane %v1700, %v1707
        %v1710 = vunpack.c.l.s4 1934713408
        %v1711 = vunpack.c.0.s8 %v1710
        %v1712 = vlaneseq
        %v1713 = vshrl.u32 %v1712, 7
        %v1714 = vsub.s32 %v1711, %v1713
        %v1715 = vrot.slane %v1701, %v1714
        %v1716 = vcombine.high %v1692, 0.0
        %v1717 = vcombine.high %v1699, 0.0
        %v1718 = vcombine.high %v1708, 0.0
        %v1719 = vcombine.high %v1715, 0.0
        %v1720 = vcombine.low %v1692, %v1699
        %v1722 = vunpack.c.l.s4 1983009808
        %v1723 = vunpack.c.0.s8 %v1722
        %v1724 = vlaneseq
        %v1725 = vshrl.u32 %v1724, 7
        %v1726 = vsub.s32 %v1723, %v1725
        %v1727 = vrot.slane %v1720, %v1726
        %v1728 = vcombine.low %v1716, %v1717
        %v1730 = vunpack.c.l.s4 1983009808
        %v1731 = vunpack.c.0.s8 %v1730
        %v1732 = vlaneseq
        %v1733 = vshrl.u32 %v1732, 7
        %v1734 = vsub.s32 %v1731, %v1733
        %v1735 = vrot.slane %v1728, %v1734
        %v1736 = vcombine.low %v1708, %v1715
        %v1738 = vunpack.c.l.s4 1983009808
        %v1739 = vunpack.c.0.s8 %v1738
        %v1740 = vlaneseq
        %v1741 = vshrl.u32 %v1740, 7
        %v1742 = vsub.s32 %v1739, %v1741
        %v1743 = vrot.slane %v1736, %v1742
        %v1744 = vcombine.low %v1718, %v1719
        %v1746 = vunpack.c.l.s4 1983009808
        %v1747 = vunpack.c.0.s8 %v1746
        %v1748 = vlaneseq
        %v1749 = vshrl.u32 %v1748, 7
        %v1750 = vsub.s32 %v1747, %v1749
        %v1751 = vrot.slane %v1744, %v1750
        %v1752 = vcombine.low %v1727, %v1735
        %v1753 = vcombine.high %v1727, %v1735
        %v1755 = vunpack.c.l.s4 1934713408
        %v1756 = vunpack.c.0.s8 %v1755
        %v1757 = vlaneseq
        %v1758 = vshrl.u32 %v1757, 7
        %v1759 = vsub.s32 %v1756, %v1758
        %v1760 = vrot.slane %v1752, %v1759
        %v1762 = vunpack.c.l.s4 1934713408
        %v1763 = vunpack.c.0.s8 %v1762
        %v1764 = vlaneseq
        %v1765 = vshrl.u32 %v1764, 7
        %v1766 = vsub.s32 %v1763, %v1765
        %v1767 = vrot.slane %v1753, %v1766
        %v1768 = vcombine.low %v1743, %v1751
        %v1769 = vcombine.high %v1743, %v1751
        %v1771 = vunpack.c.l.s4 1934713408
        %v1772 = vunpack.c.0.s8 %v1771
        %v1773 = vlaneseq
        %v1774 = vshrl.u32 %v1773, 7
        %v1775 = vsub.s32 %v1772, %v1774
        %v1776 = vrot.slane %v1768, %v1775
        %v1778 = vunpack.c.l.s4 1934713408
        %v1779 = vunpack.c.0.s8 %v1778
        %v1780 = vlaneseq
        %v1781 = vshrl.u32 %v1780, 7
        %v1782 = vsub.s32 %v1779, %v1781
        %v1783 = vrot.slane %v1769, %v1782
        %v1784 = vcombine.low %v1760, %v1776
        %v1785 = vcombine.high %v1760, %v1776
        %v1786 = vcombine.low %v1767, %v1783
        %v1787 = vcombine.high %v1767, %v1783
        %1789 = vrot.lane.b32.xlu0 %v1785, 8
        %v1790 = vpop.permute.xlu0 %1789
        %1793 = vrot.lane.b32.xlu0 %v1786, 16
        %v1794 = vpop.permute.xlu0 %1793
        %1797 = vrot.lane.b32.xlu0 %v1787, 24
        %v1798 = vpop.permute.xlu0 %1797
        %v1800 = vsel %vm1223, %v1784, %v1790
        %vm1801 = vcmask 130048
        %v1802 = vsel %vm1801, %v1800, %v1794
        %vm1803 = vcmask 195584
        %v1804 = vsel %vm1803, %v1802, %v1798
        %v1805 = vpack.c.bf16 %v1804, %v1804
        %v1806 = vld [vmem:[#allocation11] sm:$0xf]
        %v1807 = vld [vmem:[#allocation11 + $0x4] sm:$0xf]
        %v1808 = vld [vmem:[#allocation11 + $0x8] sm:$0xf]
        %v1809 = vld [vmem:[#allocation11 + $0xc] sm:$0xf]
        %v1810 = vld [vmem:[#allocation13] sm:$0x1]
        %v1812 = vlaneseq
        %v1813 = vshrl.u32 %v1812, 7
        %v1814 = vsub.s32 0, %v1813
        %v1815 = vrot.slane %v1810, %v1814
        %v1821 = vunpack.c.l.b16 %v1806
        %v1822 = vunpack.c.l.b16 %v1807
        %v1823 = vunpack.c.l.b16 %v1808
        %v1824 = vunpack.c.l.b16 %v1809
        %v1825 = vpack.c.b16 %v1822, %v1821
        %v1826 = vpack.c.b16 %v1824, %v1823
        %v1830 = vsel %vm618, %v1805, 0
        %1832 = vmatprep.subr.bf16.mxu0 0
        %1833 = vmatpush1.bf16.msra.mxu0 %v1825
        %1834 = vmatprep.subr.bf16.mxu0 0
        %1835 = vmatpush1.bf16.msra.mxu0 %v1826
        %1836 = vmatprep.subr.bf16.mxu0 0
        %1837 = vmatpush1.bf16.msra.mxu0 0
        %1838 = vmatprep.subr.bf16.mxu0 0
        %1839 = vmatpush1.bf16.msra.mxu0 0
        %1840 = vmatprep.subr.bf16.mxu0 0
        %1841 = vmatpush1.bf16.msra.mxu0 0
        %1842 = vmatprep.subr.bf16.mxu0 0
        %1843 = vmatpush1.bf16.msra.mxu0 0
        %1844 = vmatprep.subr.bf16.mxu0 0
        %1845 = vmatpush1.bf16.msra.mxu0 0
        %1846 = vmatprep.subr.bf16.mxu0 0
        %1847 = vmatpush1.bf16.msra.mxu0 0
        %1848 = vmatprep.subr.bf16.mxu0 0
        %1849 = vmatpush1.bf16.msra.mxu0 0
        %1850 = vmatprep.subr.bf16.mxu0 0
        %1851 = vmatpush1.bf16.msra.mxu0 0
        %1852 = vmatprep.subr.bf16.mxu0 0
        %1853 = vmatpush1.bf16.msra.mxu0 0
        %1854 = vmatprep.subr.bf16.mxu0 0
        %1855 = vmatpush1.bf16.msra.mxu0 0
        %1856 = vmatprep.subr.bf16.mxu0 0
        %1857 = vmatpush1.bf16.msra.mxu0 0
        %1858 = vmatprep.subr.bf16.mxu0 0
        %1859 = vmatpush1.bf16.msra.mxu0 0
        %1860 = vmatprep.subr.bf16.mxu0 0
        %1861 = vmatpush1.bf16.msra.mxu0 0
        %1862 = vmatprep.subr.bf16.mxu0 0
        %1863 = vmatpush1.bf16.msra.mxu0 0
        %1864 = vmatprep.mubr.bf16.mxu0 0
        %1865 = vmatmul.mubr.bf16.gmra.mrb[0].mxu0 %v1830
        %v1866 = vpop.f32.mrb[0].mxu0
        %v1867 = vadd.f32 %v1815, %v1866
        %v1868 = vpop.f32.mrb[0].mxu0
        %v1869 = vpop.f32.mrb[0].mxu0
        %v1870 = vpop.f32.mrb[0].mxu0
        %1871 = vdwg.mxu0
        %v1872 = vadd.f32 %v1867, %v615
        %v1873 = vld [vmem:[#allocation14] sm:$0x1]
        %v1874 = vld [vmem:[#allocation16] sm:$0x1]
        %v1875 = vsel %vm618, %v1872, 0.0
        %1876 = vadd.xlane.f32.xlu0 %v1875
        %v1877 = vpop.xlane.xlu0 %1876
        %v1878 = vmul.f32 %v1877, %v622
        %v1879 = vsub.f32 %v1872, %v1878
        %v1880 = vmul.f32 %v1879, %v1879
        %v1881 = vsel %vm618, %v1880, 0.0
        %1882 = vadd.xlane.f32.xlu0 %v1881
        %v1883 = vpop.xlane.xlu0 %1882
        %v1884 = vmul.f32 %v1883, %v622
        %v1885 = vadd.f32 %v1884, 1e-05
        %v1886 = vrsqrt.pop %v1885
        %v1887 = vmul.f32 %v1879, %v1886
        %v1889 = vlaneseq
        %v1890 = vshrl.u32 %v1889, 7
        %v1891 = vsub.s32 0, %v1890
        %v1892 = vrot.slane %v1873, %v1891
        %v1894 = vmul.f32 %v1887, %v1892
        %v1896 = vlaneseq
        %v1897 = vshrl.u32 %v1896, 7
        %v1898 = vsub.s32 0, %v1897
        %v1899 = vrot.slane %v1874, %v1898
        %v1901 = vadd.f32 %v1894, %v1899
        %v1902 = vpack.c.bf16 %v1901, %v1901
        %v1903 = vld [vmem:[#allocation17] sm:$0xf]
        %v1904 = vld [vmem:[#allocation17 + $0x4] sm:$0xf]
        %v1905 = vld [vmem:[#allocation17 + $0x8] sm:$0xf]
        %v1906 = vld [vmem:[#allocation17 + $0xc] sm:$0xf]
        %v1907 = vld [vmem:[#allocation19] sm:$0x1]
        %v1909 = vlaneseq
        %v1910 = vshrl.u32 %v1909, 7
        %v1911 = vsub.s32 0, %v1910
        %v1912 = vrot.slane %v1907, %v1911
        %v1918 = vunpack.c.l.b16 %v1903
        %v1919 = vunpack.c.l.b16 %v1904
        %v1920 = vunpack.c.l.b16 %v1905
        %v1921 = vunpack.c.l.b16 %v1906
        %v1922 = vpack.c.b16 %v1919, %v1918
        %v1923 = vpack.c.b16 %v1921, %v1920
        %v1927 = vsel %vm618, %v1902, 0
        %1929 = vmatprep.subr.bf16.mxu0 0
        %1930 = vmatpush1.bf16.msra.mxu0 %v1922
        %1931 = vmatprep.subr.bf16.mxu0 0
        %1932 = vmatpush1.bf16.msra.mxu0 %v1923
        %1933 = vmatprep.subr.bf16.mxu0 0
        %1934 = vmatpush1.bf16.msra.mxu0 0
        %1935 = vmatprep.subr.bf16.mxu0 0
        %1936 = vmatpush1.bf16.msra.mxu0 0
        %1937 = vmatprep.subr.bf16.mxu0 0
        %1938 = vmatpush1.bf16.msra.mxu0 0
        %1939 = vmatprep.subr.bf16.mxu0 0
        %1940 = vmatpush1.bf16.msra.mxu0 0
        %1941 = vmatprep.subr.bf16.mxu0 0
        %1942 = vmatpush1.bf16.msra.mxu0 0
        %1943 = vmatprep.subr.bf16.mxu0 0
        %1944 = vmatpush1.bf16.msra.mxu0 0
        %1945 = vmatprep.subr.bf16.mxu0 0
        %1946 = vmatpush1.bf16.msra.mxu0 0
        %1947 = vmatprep.subr.bf16.mxu0 0
        %1948 = vmatpush1.bf16.msra.mxu0 0
        %1949 = vmatprep.subr.bf16.mxu0 0
        %1950 = vmatpush1.bf16.msra.mxu0 0
        %1951 = vmatprep.subr.bf16.mxu0 0
        %1952 = vmatpush1.bf16.msra.mxu0 0
        %1953 = vmatprep.subr.bf16.mxu0 0
        %1954 = vmatpush1.bf16.msra.mxu0 0
        %1955 = vmatprep.subr.bf16.mxu0 0
        %1956 = vmatpush1.bf16.msra.mxu0 0
        %1957 = vmatprep.subr.bf16.mxu0 0
        %1958 = vmatpush1.bf16.msra.mxu0 0
        %1959 = vmatprep.subr.bf16.mxu0 0
        %1960 = vmatpush1.bf16.msra.mxu0 0
        %1961 = vmatprep.mubr.bf16.mxu0 0
        %1962 = vmatmul.mubr.bf16.gmra.mrb[0].mxu0 %v1927
        %v1963 = vpop.f32.mrb[0].mxu0
        %v1964 = vadd.f32 %v1912, %v1963
        %v1965 = vpop.f32.mrb[0].mxu0
        %v1966 = vpop.f32.mrb[0].mxu0
        %v1967 = vpop.f32.mrb[0].mxu0
        %1968 = vdwg.mxu0
        %v1969 = vmul.f32 %v1964, 1.702
        %v1970 = vxor.u32 %v1969, 2147483648
        %v1971 = vmul.f32 %v1970, 1.442695
        %v1972 = vpow.pop %v1971
        %v1973 = vadd.f32 %v1972, 1.0
        %v1974 = vrcp.pop %v1973
        %v1975 = vmul.f32 1.0, %v1974
        %v1976 = vmul.f32 %v1964, %v1975
        %v1977 = vpack.c.bf16 %v1976, %v1976
        %v1978 = vld [vmem:[#allocation20] sm:$0xf]
        %v1979 = vld [vmem:[#allocation20 + $0x4] sm:$0xf]
        %v1980 = vld [vmem:[#allocation20 + $0x8] sm:$0xf]
        %v1981 = vld [vmem:[#allocation20 + $0xc] sm:$0xf]
        %v1982 = vld [vmem:[#allocation20 + $0x10] sm:$0xf]
        %v1983 = vld [vmem:[#allocation20 + $0x14] sm:$0xf]
        %v1984 = vld [vmem:[#allocation20 + $0x18] sm:$0xf]
        %v1985 = vld [vmem:[#allocation20 + $0x1c] sm:$0xf]
        %v1986 = vld [vmem:[#allocation20 + $0x20] sm:$0xf]
        %v1987 = vld [vmem:[#allocation20 + $0x24] sm:$0xf]
        %v1988 = vld [vmem:[#allocation20 + $0x28] sm:$0xf]
        %v1989 = vld [vmem:[#allocation20 + $0x2c] sm:$0xf]
        %v1990 = vld [vmem:[#allocation20 + $0x30] sm:$0xf]
        %v1991 = vld [vmem:[#allocation20 + $0x34] sm:$0xf]
        %v1992 = vld [vmem:[#allocation20 + $0x38] sm:$0xf]
        %v1993 = vld [vmem:[#allocation20 + $0x3c] sm:$0xf]
        %v1994 = vld [vmem:[#allocation22] sm:$0x1]
        %v1996 = vlaneseq
        %v1997 = vshrl.u32 %v1996, 7
        %v1998 = vsub.s32 0, %v1997
        %v1999 = vrot.slane %v1994, %v1998
        %v2017 = vunpack.c.l.b16 %v1978
        %v2018 = vunpack.c.l.b16 %v1979
        %v2019 = vunpack.c.l.b16 %v1980
        %v2020 = vunpack.c.l.b16 %v1981
        %v2021 = vunpack.c.l.b16 %v1982
        %v2022 = vunpack.c.l.b16 %v1983
        %v2023 = vunpack.c.l.b16 %v1984
        %v2024 = vunpack.c.l.b16 %v1985
        %v2025 = vunpack.c.l.b16 %v1986
        %v2026 = vunpack.c.l.b16 %v1987
        %v2027 = vunpack.c.l.b16 %v1988
        %v2028 = vunpack.c.l.b16 %v1989
        %v2029 = vunpack.c.l.b16 %v1990
        %v2030 = vunpack.c.l.b16 %v1991
        %v2031 = vunpack.c.l.b16 %v1992
        %v2032 = vunpack.c.l.b16 %v1993
        %v2033 = vpack.c.b16 %v2018, %v2017
        %v2034 = vpack.c.b16 %v2020, %v2019
        %v2035 = vpack.c.b16 %v2022, %v2021
        %v2036 = vpack.c.b16 %v2024, %v2023
        %v2037 = vpack.c.b16 %v2026, %v2025
        %v2038 = vpack.c.b16 %v2028, %v2027
        %v2039 = vpack.c.b16 %v2030, %v2029
        %v2040 = vpack.c.b16 %v2032, %v2031
        %2049 = vmatprep.subr.bf16.mxu0 0
        %2050 = vmatpush1.bf16.msra.mxu0 %v2033
        %2051 = vmatprep.subr.bf16.mxu0 0
        %2052 = vmatpush1.bf16.msra.mxu0 %v2034
        %2053 = vmatprep.subr.bf16.mxu0 0
        %2054 = vmatpush1.bf16.msra.mxu0 %v2035
        %2055 = vmatprep.subr.bf16.mxu0 0
        %2056 = vmatpush1.bf16.msra.mxu0 %v2036
        %2057 = vmatprep.subr.bf16.mxu0 0
        %2058 = vmatpush1.bf16.msra.mxu0 %v2037
        %2059 = vmatprep.subr.bf16.mxu0 0
        %2060 = vmatpush1.bf16.msra.mxu0 %v2038
        %2061 = vmatprep.subr.bf16.mxu0 0
        %2062 = vmatpush1.bf16.msra.mxu0 %v2039
        %2063 = vmatprep.subr.bf16.mxu0 0
        %2064 = vmatpush1.bf16.msra.mxu0 %v2040
        %2065 = vmatprep.subr.bf16.mxu0 0
        %2066 = vmatpush1.bf16.msra.mxu0 0
        %2067 = vmatprep.subr.bf16.mxu0 0
        %2068 = vmatpush1.bf16.msra.mxu0 0
        %2069 = vmatprep.subr.bf16.mxu0 0
        %2070 = vmatpush1.bf16.msra.mxu0 0
        %2071 = vmatprep.subr.bf16.mxu0 0
        %2072 = vmatpush1.bf16.msra.mxu0 0
        %2073 = vmatprep.subr.bf16.mxu0 0
        %2074 = vmatpush1.bf16.msra.mxu0 0
        %2075 = vmatprep.subr.bf16.mxu0 0
        %2076 = vmatpush1.bf16.msra.mxu0 0
        %2077 = vmatprep.subr.bf16.mxu0 0
        %2078 = vmatpush1.bf16.msra.mxu0 0
        %2079 = vmatprep.subr.bf16.mxu0 0
        %2080 = vmatpush1.bf16.msra.mxu0 0
        %2081 = vmatprep.mubr.bf16.mxu0 0
        %2082 = vmatmul.mubr.bf16.gmra.mrb[0].mxu0 %v1977
        %v2083 = vpop.f32.mrb[0].mxu0
        %v2084 = vadd.f32 %v1999, %v2083
        %v2085 = vpop.f32.mrb[0].mxu0
        %v2086 = vpop.f32.mrb[0].mxu0
        %v2087 = vpop.f32.mrb[0].mxu0
        %2088 = vdwg.mxu0
        %v2089 = vadd.f32 %v2084, %v1872
        %2090 = vst.msk [vmem:[%s613] sm:$0xff] %vm618, %v2089
        %s2091 = sand.u32 %s322, 1
        %s2092 = scalar_lea.sflag [#allocation4], %s2091
        %s2093 = sand.u32 %s322, 1
        %s2094 = smul.addr %s2093, 8
        %s2095 = scalar_lea.vmem [#allocation23], %s2094
        // Predicated region
        $region125: #{tpu_custom_call.1} parent=71 // pred_check
          %p2096 = pneg %p332
        $region126: #{tpu_custom_call.1} parent=71 // pred_check_branch
          %2098 = sbr.rel (%p2096) target = $region128
        $region127: #{tpu_custom_call.1} parent=71 // pred_region
          %s2100 = ssub.s32 128, 128
          %2101 = vsyncadd %s2092, %s2100
          %s2102 = smul.addr %s36, 128
          %s2103 = scalar_lea.hbm %s13, %s2102
          %s2105 = sshll.u32 %s2095, 4
          %s2106 = int_to_ptr.vmem [resolvable:$true] %s2105
          %2108 = dma.vmem_to_hbm [thread:$0]  %s2106, 128, %s2103, %s2092
        $region128: #{tpu_custom_call.1} parent=71 // pred_fallthru
          _
      $region72: #{tpu_custom_call.1} parent=5 // pred_fallthru
        _
      %p2109 = scmp.le.s32.totalorder 2, %s31
      // Predicated region
      $region129: #{tpu_custom_call.1} parent=5 // pred_check
        %p2110 = pneg %p2109
      $region130: #{tpu_custom_call.1} parent=5 // pred_check_branch
        %2112 = sbr.rel (%p2110) target = $region132
      $region131: #{tpu_custom_call.1} parent=5 // pred_region
        %s2113 = ssub.s32 %s31, 2
        // Predicated region
        $region133: #{tpu_custom_call.1} parent=131 // pred_check
          %p2114 = pneg %p338
        $region134: #{tpu_custom_call.1} parent=131 // pred_check_branch
          %2116 = sbr.rel (%p2114) target = $region136
        $region135: #{tpu_custom_call.1} parent=131 // pred_region
          %s2117 = sand.u32 %s323, 1
          %s2118 = scalar_lea.sflag [#allocation4], %s2117
          %s2119 = sand.u32 %s323, 1
          %s2120 = smul.addr %s2119, 8
          %s2121 = scalar_lea.vmem [#allocation23], %s2120
          %2122 = dma.done %s2118, 128
        $region136: #{tpu_custom_call.1} parent=131 // pred_fallthru
          _
      $region132: #{tpu_custom_call.1} parent=5 // pred_fallthru
        _
    $region6: #{tpu_custom_call.1} parent=1 // loop_footer
      %s35 = sadd.s32 1, %s31
    $region7: #{tpu_custom_call.1} parent=1 // loop_footer_branch
      %30 = sbr.rel target = $region3
    $region8: #{tpu_custom_call.1} parent=1 // loop_exit
      _
    %2123 = vsyncpa [#allocation3], 1
    %s2124 = scalar_lea.sflag [#allocation3], 1
    %2125 = vsyncpa %s2124, 1
    %2126 = vsyncpa [#allocation6], 1
    %2127 = vsyncpa [#allocation9], 1
    %2128 = vsyncpa [#allocation12], 1
    %2129 = vsyncpa [#allocation15], 1
    %2130 = vsyncpa [#allocation18], 1
    %2131 = vsyncpa [#allocation21], 1
    %2132 = vsyncpa [#allocation4], 1
    %s2133 = scalar_lea.sflag [#allocation4], 1
    %2134 = vsyncpa %s2133, 1

</llo_original>
